<compile_context>
chip_gen: v5e
topology: v5e:2x2
jax: 0.10.0
libtpu: 0.0.40
codegen_flags: <defaults>
</compile_context>

<pallas_src>
import functools

import jax
import jax.numpy as jnp
import numpy as np
from jax.experimental import pallas as pl
from jax.experimental.pallas import tpu as pltpu


# ------------------------------ Pallas kernel ------------------------------ #

def _bottleneck_kernel(x_ref, w1_ref, b1_ref, w2_ref, b2_ref, w3_ref, b3_ref,
                       mask_ref, o_ref, p_ref, *, H, W):
    """Whole Bottleneck block for one image; all intermediates stay in VMEM.

    x_ref    : (H*W, Cin)      f32   input tokens (channels on the lane axis)
    w1_ref   : (Cin, Cmid)     bf16  1x1 conv weight, BN1 scale folded in
    w2_ref   : (9, Cmid, Cmid) bf16  3x3 conv taps (k = kh*3+kw), BN2 folded
    w3_ref   : (Cmid, Cout)    bf16  1x1 conv weight, BN3 scale folded in
    b*_ref   : (1, C)          f32   folded BN biases
    mask_ref : (9, H*W, 1)     f32   border / row-wrap masks for conv2 taps
    o_ref    : (H*W, Cout)     f32   output tokens
    p_ref    : (H*W + 2*(W+1), Cmid) f32 VMEM scratch: flat zero-padded y1
    """
    HW = H * W
    pad = W + 1
    cmid = w1_ref.shape[1]

    x = x_ref[...]                                           # (HW, Cin) f32

    # ---- conv1 (1x1) + folded BN + ReLU: bf16 MXU, f32 accumulate -------- #
    y1 = jnp.dot(x.astype(jnp.bfloat16), w1_ref[...],
                 preferred_element_type=jnp.float32)
    y1 = jnp.maximum(y1 + b1_ref[...], 0.0)                  # (HW, Cmid) f32

    # ---- conv2 (3x3, stride=1, pad=1) as 9 shifted matmuls --------------- #
    # p_ref holds y1 flattened over tokens with (W+1) zero rows of padding on
    # each side.  Tap (kh, kw) of output token t reads padded row
    # pad + t + (kh-1)*W + (kw-1); out-of-image and row-wrap reads are zeroed
    # by the precomputed per-tap masks.
    p_ref[pl.ds(0, pad), :] = jnp.zeros((pad, cmid), jnp.float32)
    p_ref[pl.ds(pad + HW, pad), :] = jnp.zeros((pad, cmid), jnp.float32)
    p_ref[pl.ds(pad, HW), :] = y1

    acc = jnp.zeros((HW, cmid), jnp.float32)
    for kh in range(3):
        for kw in range(3):
            k = kh * 3 + kw
            shift = (kh - 1) * W + (kw - 1)                  # static int
            tap = p_ref[pl.ds(pad + shift, HW), :] * mask_ref[k]
            acc = acc + jnp.dot(tap.astype(jnp.bfloat16), w2_ref[k],
                                preferred_element_type=jnp.float32)
    y2 = jnp.maximum(acc + b2_ref[...], 0.0)                 # (HW, Cmid) f32

    # ---- conv3 (1x1) + folded BN + identity residual + ReLU -------------- #
    y3 = jnp.dot(y2.astype(jnp.bfloat16), w3_ref[...],
                 preferred_element_type=jnp.float32)
    o_ref[...] = jnp.maximum(y3 + b3_ref[...] + x, 0.0).astype(o_ref.dtype)


# ------------------------------- JAX wrapper -------------------------------- #

def _fold_bn(gamma, beta, mean, var, eps=1e-5):
    scale = gamma / jnp.sqrt(var + eps)
    return scale, beta - mean * scale


def _conv2_tap_masks(H, W):
    """(9, H*W, 1) f32: 1 where the (kh, kw) tap of token (h, w) is in-image."""
    hh, ww = np.meshgrid(np.arange(H), np.arange(W), indexing="ij")
    masks = []
    for kh in range(3):
        for kw in range(3):
            dy, dx = kh - 1, kw - 1
            valid = ((hh + dy >= 0) & (hh + dy < H) &
                     (ww + dx >= 0) & (ww + dx < W))
            masks.append(valid.reshape(H * W, 1))
    return jnp.asarray(np.stack(masks, axis=0), dtype=jnp.float32)


@jax.jit
def bottleneck_forward(x_nchw, params):
    """Bottleneck(in_channel=4*out_channel, out_channel, stride=1, downsample=None)."""
    n, cin, h, w = x_nchw.shape
    hw = h * w
    cmid = params["w1"].shape[0]
    cout = params["w3"].shape[0]
    assert cin == cout == 4 * cmid, "identity residual needs Cin == 4*Cmid == Cout"

    s1, b1 = _fold_bn(params["g1"], params["be1"], params["m1"], params["v1"])
    s2, b2 = _fold_bn(params["g2"], params["be2"], params["m2"], params["v2"])
    s3, b3 = _fold_bn(params["g3"], params["be3"], params["m3"], params["v3"])

    # Fold the BN scale into the conv weights; cast weights to bf16.
    w1m = (params["w1"].reshape(cmid, cin).T * s1[None, :]).astype(jnp.bfloat16)
    w2m = (jnp.transpose(params["w2"], (2, 3, 1, 0)).reshape(9, cmid, cmid)
           * s2[None, None, :]).astype(jnp.bfloat16)
    w3m = (params["w3"].reshape(cout, cmid).T * s3[None, :]).astype(jnp.bfloat16)
    b1r = b1.reshape(1, cmid).astype(jnp.float32)
    b2r = b2.reshape(1, cmid).astype(jnp.float32)
    b3r = b3.reshape(1, cout).astype(jnp.float32)

    masks = _conv2_tap_masks(h, w)                           # (9, HW, 1) f32

    # NCHW -> (N, H*W, C) token-major layout (lane axis = channels).
    x_tok = jnp.transpose(x_nchw, (0, 2, 3, 1)).reshape(n, hw, cin)

    flops = 2 * n * hw * (cin * cmid + 9 * cmid * cmid + cmid * cout)
    bytes_accessed = ((n * hw * (cin + cout)) * 4
                      + (w1m.size + w2m.size + w3m.size) * 2
                      + (b1r.size + b2r.size + b3r.size + masks.size) * 4)

    out_tok = pl.pallas_call(
        functools.partial(_bottleneck_kernel, H=h, W=w),
        out_shape=jax.ShapeDtypeStruct((n, hw, cout), x_nchw.dtype),
        grid=(n,),
        in_specs=[
            pl.BlockSpec((None, hw, cin), lambda i: (i, 0, 0)),   # x tokens (per image)
            pl.BlockSpec((cin, cmid), lambda i: (0, 0)),          # w1 (BN folded)
            pl.BlockSpec((1, cmid), lambda i: (0, 0)),            # b1
            pl.BlockSpec((9, cmid, cmid), lambda i: (0, 0, 0)),   # w2 taps (BN folded)
            pl.BlockSpec((1, cmid), lambda i: (0, 0)),            # b2
            pl.BlockSpec((cmid, cout), lambda i: (0, 0)),         # w3 (BN folded)
            pl.BlockSpec((1, cout), lambda i: (0, 0)),            # b3
            pl.BlockSpec((9, hw, 1), lambda i: (0, 0, 0)),        # conv2 border masks
        ],
        out_specs=pl.BlockSpec((None, hw, cout), lambda i: (i, 0, 0)),
        scratch_shapes=[pltpu.VMEM((hw + 2 * (w + 1), cmid), jnp.float32)],
        compiler_params=pltpu.CompilerParams(
            dimension_semantics=("parallel",)),
        cost_estimate=pl.CostEstimate(
            flops=flops, transcendentals=0, bytes_accessed=bytes_accessed),
    )(x_tok, w1m, b1r, w2m, b2r, w3m, b3r, masks)

    return jnp.transpose(out_tok.reshape(n, h, w, cout), (0, 3, 1, 2))


# ----------------------- pure-JAX reference (for check) --------------------- #

def _conv_nhwc(x, w_pt, padding):
    w_hwio = jnp.transpose(w_pt, (2, 3, 1, 0))
    return jax.lax.conv_general_dilated(
        x, w_hwio, (1, 1), padding,
        dimension_numbers=("NHWC", "HWIO", "NHWC"),
        precision=jax.lax.Precision.HIGHEST)


def bottleneck_reference(x_nchw, params):
    x = jnp.transpose(x_nchw, (0, 2, 3, 1))
    s1, b1 = _fold_bn(params["g1"], params["be1"], params["m1"], params["v1"])
    s2, b2 = _fold_bn(params["g2"], params["be2"], params["m2"], params["v2"])
    s3, b3 = _fold_bn(params["g3"], params["be3"], params["m3"], params["v3"])
    y = jnp.maximum(_conv_nhwc(x, params["w1"], "VALID") * s1 + b1, 0.0)
    y = jnp.maximum(_conv_nhwc(y, params["w2"], ((1, 1), (1, 1))) * s2 + b2, 0.0)
    y = _conv_nhwc(y, params["w3"], "VALID") * s3 + b3
    y = jnp.maximum(y + x, 0.0)
    return jnp.transpose(y, (0, 3, 1, 2))


# ---------------------------------- main ------------------------------------ #

def _make_params(key, cin, cmid, cout):
    ks = jax.random.split(key, 6)
    f32 = jnp.float32

    def bn(k, c):
        k1, k2, k3, k4 = jax.random.split(k, 4)
        return dict(
            gamma=1.0 + 0.1 * jax.random.normal(k1, (c,), f32),
            beta=0.1 * jax.random.normal(k2, (c,), f32),
            mean=0.1 * jax.random.normal(k3, (c,), f32),
            var=1.0 + 0.5 * jax.random.uniform(k4, (c,), f32),
        )

    bn1, bn2, bn3 = bn(ks[3], cmid), bn(ks[4], cmid), bn(ks[5], cout)
    return {
        "w1": 0.1 * jax.random.normal(ks[0], (cmid, cin, 1, 1), f32),
        "w2": 0.1 * jax.random.normal(ks[1], (cmid, cmid, 3, 3), f32),
        "w3": 0.1 * jax.random.normal(ks[2], (cout, cmid, 1, 1), f32),
        "g1": bn1["gamma"], "be1": bn1["beta"], "m1": bn1["mean"], "v1": bn1["var"],
        "g2": bn2["gamma"], "be2": bn2["beta"], "m2": bn2["mean"], "v2": bn2["var"],
        "g3": bn3["gamma"], "be3": bn3["beta"], "m3": bn3["mean"], "v3": bn3["var"],
    }


if __name__ == "__main__":
    # Bottleneck(in_channel=128, out_channel=32), stride=1, downsample=None.
    # Cin = Cout = 128 keeps the channel (lane) axis 128-dense.
    N, CMID, H, W = 2, 32, 8, 8
    CIN = COUT = CMID * 4                       # expansion = 4

    key = jax.random.PRNGKey(0)
    kx, kp = jax.random.split(key)
    x = jax.random.normal(kx, (N, CIN, H, W), jnp.float32)   # NCHW like PyTorch
    params = _make_params(kp, CIN, CMID, COUT)

    out = jax.block_until_ready(bottleneck_forward(x, params))
    ref = jax.block_until_ready(bottleneck_reference(x, params))

    assert out.shape == (N, COUT, H, W), out.shape
    # bf16 matmul inputs with f32 accumulation -> bf16-appropriate tolerance.
    assert jnp.allclose(out, ref, rtol=2e-2, atol=2e-2), (
        float(jnp.max(jnp.abs(out - ref))))

    print("KERNEL_OK")
</pallas_src>

<mosaic_0001>
module attributes {stable_mosaic.version = 11 : i64} {
  func.func @_bottleneck_kernel(%arg0: i32, %arg1: memref<1x64x128xf32, #tpu.memory_space<vmem>>, %arg2: memref<128x32xbf16, #tpu.memory_space<vmem>>, %arg3: memref<1x32xf32, #tpu.memory_space<vmem>>, %arg4: memref<9x32x32xbf16, #tpu.memory_space<vmem>>, %arg5: memref<1x32xf32, #tpu.memory_space<vmem>>, %arg6: memref<32x128xbf16, #tpu.memory_space<vmem>>, %arg7: memref<1x128xf32, #tpu.memory_space<vmem>>, %arg8: memref<9x64x1xf32, #tpu.memory_space<vmem>>, %arg9: memref<1x64x128xf32, #tpu.memory_space<vmem>>, %arg10: memref<82x32xf32, #tpu.memory_space<vmem>>) attributes {dimension_semantics = [#tpu.dimension_semantics<parallel>], iteration_bounds = array<i64: 2>, scalar_prefetch = 0 : i64, scratch_operands = 1 : i64, tpu.core_type = #tpu.core_type<tc>, window_params = [{transform_indices = @transform_0, window_bounds = array<i64: 1, 64, 128>}, {pipeline_mode = #tpu.pipeline_mode<synchronous>, transform_indices = @transform_1, window_bounds = array<i64: 128, 32>}, {pipeline_mode = #tpu.pipeline_mode<synchronous>, transform_indices = @transform_2, window_bounds = array<i64: 1, 32>}, {pipeline_mode = #tpu.pipeline_mode<synchronous>, transform_indices = @transform_3, window_bounds = array<i64: 9, 32, 32>}, {pipeline_mode = #tpu.pipeline_mode<synchronous>, transform_indices = @transform_4, window_bounds = array<i64: 1, 32>}, {pipeline_mode = #tpu.pipeline_mode<synchronous>, transform_indices = @transform_5, window_bounds = array<i64: 32, 128>}, {pipeline_mode = #tpu.pipeline_mode<synchronous>, transform_indices = @transform_6, window_bounds = array<i64: 1, 128>}, {pipeline_mode = #tpu.pipeline_mode<synchronous>, transform_indices = @transform_7, window_bounds = array<i64: 9, 64, 1>}, {transform_indices = @transform_8, window_bounds = array<i64: 1, 64, 128>}]} {
    %c0 = arith.constant 0 : index
    %c0_0 = arith.constant 0 : index
    %c0_1 = arith.constant 0 : index
    %0 = vector.load %arg1[%c0, %c0_0, %c0_1] : memref<1x64x128xf32, #tpu.memory_space<vmem>>, vector<1x64x128xf32>
    %1 = vector.shape_cast %0 : vector<1x64x128xf32> to vector<64x128xf32>
    %2 = arith.truncf %1 : vector<64x128xf32> to vector<64x128xbf16>
    %c0_2 = arith.constant 0 : index
    %c0_3 = arith.constant 0 : index
    %3 = vector.load %arg2[%c0_2, %c0_3] : memref<128x32xbf16, #tpu.memory_space<vmem>>, vector<128x32xbf16>
    %cst = arith.constant dense<0.000000e+00> : vector<64x32xf32>
    %4 = tpu.matmul %2, %3, %cst {dimension_numbers = #tpu.dot_dimension_numbers<[1], [0], [0], [1], [0, 0, 1, 1], [], []>} : vector<64x128xbf16>, vector<128x32xbf16>, vector<64x32xf32> -> vector<64x32xf32>
    %c0_4 = arith.constant 0 : index
    %c0_5 = arith.constant 0 : index
    %5 = vector.load %arg3[%c0_4, %c0_5] : memref<1x32xf32, #tpu.memory_space<vmem>>, vector<1x32xf32>
    %6 = vector.broadcast %5 : vector<1x32xf32> to vector<64x32xf32>
    %7 = arith.addf %4, %6 : vector<64x32xf32>
    %cst_6 = arith.constant 0.000000e+00 : f32
    %8 = vector.broadcast %cst_6 : f32 to vector<64x32xf32>
    %9 = arith.maximumf %7, %8 : vector<64x32xf32>
    %cst_7 = arith.constant 0.000000e+00 : f32
    %10 = vector.broadcast %cst_7 : f32 to vector<9x32xf32>
    %c0_8 = arith.constant 0 : index
    %c0_9 = arith.constant 0 : index
    %11 = vector.load %arg10[%c0_8, %c0_9] : memref<82x32xf32, #tpu.memory_space<vmem>>, vector<9x32xf32>
    tpu.vector_store %arg10[%c0_8, %c0_9], %10 {strides = array<i32>} : memref<82x32xf32, #tpu.memory_space<vmem>>, vector<9x32xf32>,
    %cst_10 = arith.constant 0.000000e+00 : f32
    %12 = vector.broadcast %cst_10 : f32 to vector<9x32xf32>
    %c73 = arith.constant 73 : index
    %c0_11 = arith.constant 0 : index
    %13 = vector.load %arg10[%c73, %c0_11] : memref<82x32xf32, #tpu.memory_space<vmem>>, vector<9x32xf32>
    tpu.vector_store %arg10[%c73, %c0_11], %12 {strides = array<i32>} : memref<82x32xf32, #tpu.memory_space<vmem>>, vector<9x32xf32>,
    %c9 = arith.constant 9 : index
    %c0_12 = arith.constant 0 : index
    %14 = vector.load %arg10[%c9, %c0_12] : memref<82x32xf32, #tpu.memory_space<vmem>>, vector<64x32xf32>
    tpu.vector_store %arg10[%c9, %c0_12], %9 {strides = array<i32>} : memref<82x32xf32, #tpu.memory_space<vmem>>, vector<64x32xf32>,
    %cst_13 = arith.constant 0.000000e+00 : f32
    %15 = vector.broadcast %cst_13 : f32 to vector<64x32xf32>
    %c0_14 = arith.constant 0 : index
    %c0_15 = arith.constant 0 : index
    %16 = vector.load %arg10[%c0_14, %c0_15] : memref<82x32xf32, #tpu.memory_space<vmem>>, vector<64x32xf32>
    %c0_16 = arith.constant 0 : index
    %c0_17 = arith.constant 0 : index
    %c0_18 = arith.constant 0 : index
    %17 = vector.load %arg8[%c0_16, %c0_17, %c0_18] : memref<9x64x1xf32, #tpu.memory_space<vmem>>, vector<1x64x1xf32>
    %18 = vector.shape_cast %17 : vector<1x64x1xf32> to vector<64x1xf32>
    %19 = vector.broadcast %18 : vector<64x1xf32> to vector<64x32xf32>
    %20 = arith.mulf %16, %19 : vector<64x32xf32>
    %21 = arith.truncf %20 : vector<64x32xf32> to vector<64x32xbf16>
    %c0_19 = arith.constant 0 : index
    %c0_20 = arith.constant 0 : index
    %c0_21 = arith.constant 0 : index
    %22 = vector.load %arg4[%c0_19, %c0_20, %c0_21] : memref<9x32x32xbf16, #tpu.memory_space<vmem>>, vector<1x32x32xbf16>
    %23 = vector.shape_cast %22 : vector<1x32x32xbf16> to vector<32x32xbf16>
    %cst_22 = arith.constant dense<0.000000e+00> : vector<64x32xf32>
    %24 = tpu.matmul %21, %23, %cst_22 {dimension_numbers = #tpu.dot_dimension_numbers<[1], [0], [0], [1], [0, 0, 1, 1], [], []>} : vector<64x32xbf16>, vector<32x32xbf16>, vector<64x32xf32> -> vector<64x32xf32>
    %25 = arith.addf %15, %24 : vector<64x32xf32>
    %c1 = arith.constant 1 : index
    %c0_23 = arith.constant 0 : index
    %26 = vector.load %arg10[%c1, %c0_23] : memref<82x32xf32, #tpu.memory_space<vmem>>, vector<64x32xf32>
    %c1_24 = arith.constant 1 : index
    %c0_25 = arith.constant 0 : index
    %c0_26 = arith.constant 0 : index
    %27 = vector.load %arg8[%c1_24, %c0_25, %c0_26] : memref<9x64x1xf32, #tpu.memory_space<vmem>>, vector<1x64x1xf32>
    %28 = vector.shape_cast %27 : vector<1x64x1xf32> to vector<64x1xf32>
    %29 = vector.broadcast %28 : vector<64x1xf32> to vector<64x32xf32>
    %30 = arith.mulf %26, %29 : vector<64x32xf32>
    %31 = arith.truncf %30 : vector<64x32xf32> to vector<64x32xbf16>
    %c1_27 = arith.constant 1 : index
    %c0_28 = arith.constant 0 : index
    %c0_29 = arith.constant 0 : index
    %32 = vector.load %arg4[%c1_27, %c0_28, %c0_29] : memref<9x32x32xbf16, #tpu.memory_space<vmem>>, vector<1x32x32xbf16>
    %33 = vector.shape_cast %32 : vector<1x32x32xbf16> to vector<32x32xbf16>
    %cst_30 = arith.constant dense<0.000000e+00> : vector<64x32xf32>
    %34 = tpu.matmul %31, %33, %cst_30 {dimension_numbers = #tpu.dot_dimension_numbers<[1], [0], [0], [1], [0, 0, 1, 1], [], []>} : vector<64x32xbf16>, vector<32x32xbf16>, vector<64x32xf32> -> vector<64x32xf32>
    %35 = arith.addf %25, %34 : vector<64x32xf32>
    %c2 = arith.constant 2 : index
    %c0_31 = arith.constant 0 : index
    %36 = vector.load %arg10[%c2, %c0_31] : memref<82x32xf32, #tpu.memory_space<vmem>>, vector<64x32xf32>
    %c2_32 = arith.constant 2 : index
    %c0_33 = arith.constant 0 : index
    %c0_34 = arith.constant 0 : index
    %37 = vector.load %arg8[%c2_32, %c0_33, %c0_34] : memref<9x64x1xf32, #tpu.memory_space<vmem>>, vector<1x64x1xf32>
    %38 = vector.shape_cast %37 : vector<1x64x1xf32> to vector<64x1xf32>
    %39 = vector.broadcast %38 : vector<64x1xf32> to vector<64x32xf32>
    %40 = arith.mulf %36, %39 : vector<64x32xf32>
    %41 = arith.truncf %40 : vector<64x32xf32> to vector<64x32xbf16>
    %c2_35 = arith.constant 2 : index
    %c0_36 = arith.constant 0 : index
    %c0_37 = arith.constant 0 : index
    %42 = vector.load %arg4[%c2_35, %c0_36, %c0_37] : memref<9x32x32xbf16, #tpu.memory_space<vmem>>, vector<1x32x32xbf16>
    %43 = vector.shape_cast %42 : vector<1x32x32xbf16> to vector<32x32xbf16>
    %cst_38 = arith.constant dense<0.000000e+00> : vector<64x32xf32>
    %44 = tpu.matmul %41, %43, %cst_38 {dimension_numbers = #tpu.dot_dimension_numbers<[1], [0], [0], [1], [0, 0, 1, 1], [], []>} : vector<64x32xbf16>, vector<32x32xbf16>, vector<64x32xf32> -> vector<64x32xf32>
    %45 = arith.addf %35, %44 : vector<64x32xf32>
    %c8 = arith.constant 8 : index
    %c0_39 = arith.constant 0 : index
    %46 = vector.load %arg10[%c8, %c0_39] : memref<82x32xf32, #tpu.memory_space<vmem>>, vector<64x32xf32>
    %c3 = arith.constant 3 : index
    %c0_40 = arith.constant 0 : index
    %c0_41 = arith.constant 0 : index
    %47 = vector.load %arg8[%c3, %c0_40, %c0_41] : memref<9x64x1xf32, #tpu.memory_space<vmem>>, vector<1x64x1xf32>
    %48 = vector.shape_cast %47 : vector<1x64x1xf32> to vector<64x1xf32>
    %49 = vector.broadcast %48 : vector<64x1xf32> to vector<64x32xf32>
    %50 = arith.mulf %46, %49 : vector<64x32xf32>
    %51 = arith.truncf %50 : vector<64x32xf32> to vector<64x32xbf16>
    %c3_42 = arith.constant 3 : index
    %c0_43 = arith.constant 0 : index
    %c0_44 = arith.constant 0 : index
    %52 = vector.load %arg4[%c3_42, %c0_43, %c0_44] : memref<9x32x32xbf16, #tpu.memory_space<vmem>>, vector<1x32x32xbf16>
    %53 = vector.shape_cast %52 : vector<1x32x32xbf16> to vector<32x32xbf16>
    %cst_45 = arith.constant dense<0.000000e+00> : vector<64x32xf32>
    %54 = tpu.matmul %51, %53, %cst_45 {dimension_numbers = #tpu.dot_dimension_numbers<[1], [0], [0], [1], [0, 0, 1, 1], [], []>} : vector<64x32xbf16>, vector<32x32xbf16>, vector<64x32xf32> -> vector<64x32xf32>
    %55 = arith.addf %45, %54 : vector<64x32xf32>
    %c9_46 = arith.constant 9 : index
    %c0_47 = arith.constant 0 : index
    %56 = vector.load %arg10[%c9_46, %c0_47] : memref<82x32xf32, #tpu.memory_space<vmem>>, vector<64x32xf32>
    %c4 = arith.constant 4 : index
    %c0_48 = arith.constant 0 : index
    %c0_49 = arith.constant 0 : index
    %57 = vector.load %arg8[%c4, %c0_48, %c0_49] : memref<9x64x1xf32, #tpu.memory_space<vmem>>, vector<1x64x1xf32>
    %58 = vector.shape_cast %57 : vector<1x64x1xf32> to vector<64x1xf32>
    %59 = vector.broadcast %58 : vector<64x1xf32> to vector<64x32xf32>
    %60 = arith.mulf %56, %59 : vector<64x32xf32>
    %61 = arith.truncf %60 : vector<64x32xf32> to vector<64x32xbf16>
    %c4_50 = arith.constant 4 : index
    %c0_51 = arith.constant 0 : index
    %c0_52 = arith.constant 0 : index
    %62 = vector.load %arg4[%c4_50, %c0_51, %c0_52] : memref<9x32x32xbf16, #tpu.memory_space<vmem>>, vector<1x32x32xbf16>
    %63 = vector.shape_cast %62 : vector<1x32x32xbf16> to vector<32x32xbf16>
    %cst_53 = arith.constant dense<0.000000e+00> : vector<64x32xf32>
    %64 = tpu.matmul %61, %63, %cst_53 {dimension_numbers = #tpu.dot_dimension_numbers<[1], [0], [0], [1], [0, 0, 1, 1], [], []>} : vector<64x32xbf16>, vector<32x32xbf16>, vector<64x32xf32> -> vector<64x32xf32>
    %65 = arith.addf %55, %64 : vector<64x32xf32>
    %c10 = arith.constant 10 : index
    %c0_54 = arith.constant 0 : index
    %66 = vector.load %arg10[%c10, %c0_54] : memref<82x32xf32, #tpu.memory_space<vmem>>, vector<64x32xf32>
    %c5 = arith.constant 5 : index
    %c0_55 = arith.constant 0 : index
    %c0_56 = arith.constant 0 : index
    %67 = vector.load %arg8[%c5, %c0_55, %c0_56] : memref<9x64x1xf32, #tpu.memory_space<vmem>>, vector<1x64x1xf32>
    %68 = vector.shape_cast %67 : vector<1x64x1xf32> to vector<64x1xf32>
    %69 = vector.broadcast %68 : vector<64x1xf32> to vector<64x32xf32>
    %70 = arith.mulf %66, %69 : vector<64x32xf32>
    %71 = arith.truncf %70 : vector<64x32xf32> to vector<64x32xbf16>
    %c5_57 = arith.constant 5 : index
    %c0_58 = arith.constant 0 : index
    %c0_59 = arith.constant 0 : index
    %72 = vector.load %arg4[%c5_57, %c0_58, %c0_59] : memref<9x32x32xbf16, #tpu.memory_space<vmem>>, vector<1x32x32xbf16>
    %73 = vector.shape_cast %72 : vector<1x32x32xbf16> to vector<32x32xbf16>
    %cst_60 = arith.constant dense<0.000000e+00> : vector<64x32xf32>
    %74 = tpu.matmul %71, %73, %cst_60 {dimension_numbers = #tpu.dot_dimension_numbers<[1], [0], [0], [1], [0, 0, 1, 1], [], []>} : vector<64x32xbf16>, vector<32x32xbf16>, vector<64x32xf32> -> vector<64x32xf32>
    %75 = arith.addf %65, %74 : vector<64x32xf32>
    %c16 = arith.constant 16 : index
    %c0_61 = arith.constant 0 : index
    %76 = vector.load %arg10[%c16, %c0_61] : memref<82x32xf32, #tpu.memory_space<vmem>>, vector<64x32xf32>
    %c6 = arith.constant 6 : index
    %c0_62 = arith.constant 0 : index
    %c0_63 = arith.constant 0 : index
    %77 = vector.load %arg8[%c6, %c0_62, %c0_63] : memref<9x64x1xf32, #tpu.memory_space<vmem>>, vector<1x64x1xf32>
    %78 = vector.shape_cast %77 : vector<1x64x1xf32> to vector<64x1xf32>
    %79 = vector.broadcast %78 : vector<64x1xf32> to vector<64x32xf32>
    %80 = arith.mulf %76, %79 : vector<64x32xf32>
    %81 = arith.truncf %80 : vector<64x32xf32> to vector<64x32xbf16>
    %c6_64 = arith.constant 6 : index
    %c0_65 = arith.constant 0 : index
    %c0_66 = arith.constant 0 : index
    %82 = vector.load %arg4[%c6_64, %c0_65, %c0_66] : memref<9x32x32xbf16, #tpu.memory_space<vmem>>, vector<1x32x32xbf16>
    %83 = vector.shape_cast %82 : vector<1x32x32xbf16> to vector<32x32xbf16>
    %cst_67 = arith.constant dense<0.000000e+00> : vector<64x32xf32>
    %84 = tpu.matmul %81, %83, %cst_67 {dimension_numbers = #tpu.dot_dimension_numbers<[1], [0], [0], [1], [0, 0, 1, 1], [], []>} : vector<64x32xbf16>, vector<32x32xbf16>, vector<64x32xf32> -> vector<64x32xf32>
    %85 = arith.addf %75, %84 : vector<64x32xf32>
    %c17 = arith.constant 17 : index
    %c0_68 = arith.constant 0 : index
    %86 = vector.load %arg10[%c17, %c0_68] : memref<82x32xf32, #tpu.memory_space<vmem>>, vector<64x32xf32>
    %c7 = arith.constant 7 : index
    %c0_69 = arith.constant 0 : index
    %c0_70 = arith.constant 0 : index
    %87 = vector.load %arg8[%c7, %c0_69, %c0_70] : memref<9x64x1xf32, #tpu.memory_space<vmem>>, vector<1x64x1xf32>
    %88 = vector.shape_cast %87 : vector<1x64x1xf32> to vector<64x1xf32>
    %89 = vector.broadcast %88 : vector<64x1xf32> to vector<64x32xf32>
    %90 = arith.mulf %86, %89 : vector<64x32xf32>
    %91 = arith.truncf %90 : vector<64x32xf32> to vector<64x32xbf16>
    %c7_71 = arith.constant 7 : index
    %c0_72 = arith.constant 0 : index
    %c0_73 = arith.constant 0 : index
    %92 = vector.load %arg4[%c7_71, %c0_72, %c0_73] : memref<9x32x32xbf16, #tpu.memory_space<vmem>>, vector<1x32x32xbf16>
    %93 = vector.shape_cast %92 : vector<1x32x32xbf16> to vector<32x32xbf16>
    %cst_74 = arith.constant dense<0.000000e+00> : vector<64x32xf32>
    %94 = tpu.matmul %91, %93, %cst_74 {dimension_numbers = #tpu.dot_dimension_numbers<[1], [0], [0], [1], [0, 0, 1, 1], [], []>} : vector<64x32xbf16>, vector<32x32xbf16>, vector<64x32xf32> -> vector<64x32xf32>
    %95 = arith.addf %85, %94 : vector<64x32xf32>
    %c18 = arith.constant 18 : index
    %c0_75 = arith.constant 0 : index
    %96 = vector.load %arg10[%c18, %c0_75] : memref<82x32xf32, #tpu.memory_space<vmem>>, vector<64x32xf32>
    %c8_76 = arith.constant 8 : index
    %c0_77 = arith.constant 0 : index
    %c0_78 = arith.constant 0 : index
    %97 = vector.load %arg8[%c8_76, %c0_77, %c0_78] : memref<9x64x1xf32, #tpu.memory_space<vmem>>, vector<1x64x1xf32>
    %98 = vector.shape_cast %97 : vector<1x64x1xf32> to vector<64x1xf32>
    %99 = vector.broadcast %98 : vector<64x1xf32> to vector<64x32xf32>
    %100 = arith.mulf %96, %99 : vector<64x32xf32>
    %101 = arith.truncf %100 : vector<64x32xf32> to vector<64x32xbf16>
    %c8_79 = arith.constant 8 : index
    %c0_80 = arith.constant 0 : index
    %c0_81 = arith.constant 0 : index
    %102 = vector.load %arg4[%c8_79, %c0_80, %c0_81] : memref<9x32x32xbf16, #tpu.memory_space<vmem>>, vector<1x32x32xbf16>
    %103 = vector.shape_cast %102 : vector<1x32x32xbf16> to vector<32x32xbf16>
    %cst_82 = arith.constant dense<0.000000e+00> : vector<64x32xf32>
    %104 = tpu.matmul %101, %103, %cst_82 {dimension_numbers = #tpu.dot_dimension_numbers<[1], [0], [0], [1], [0, 0, 1, 1], [], []>} : vector<64x32xbf16>, vector<32x32xbf16>, vector<64x32xf32> -> vector<64x32xf32>
    %105 = arith.addf %95, %104 : vector<64x32xf32>
    %c0_83 = arith.constant 0 : index
    %c0_84 = arith.constant 0 : index
    %106 = vector.load %arg5[%c0_83, %c0_84] : memref<1x32xf32, #tpu.memory_space<vmem>>, vector<1x32xf32>
    %107 = vector.broadcast %106 : vector<1x32xf32> to vector<64x32xf32>
    %108 = arith.addf %105, %107 : vector<64x32xf32>
    %cst_85 = arith.constant 0.000000e+00 : f32
    %109 = vector.broadcast %cst_85 : f32 to vector<64x32xf32>
    %110 = arith.maximumf %108, %109 : vector<64x32xf32>
    %111 = arith.truncf %110 : vector<64x32xf32> to vector<64x32xbf16>
    %c0_86 = arith.constant 0 : index
    %c0_87 = arith.constant 0 : index
    %112 = vector.load %arg6[%c0_86, %c0_87] : memref<32x128xbf16, #tpu.memory_space<vmem>>, vector<32x128xbf16>
    %cst_88 = arith.constant dense<0.000000e+00> : vector<64x128xf32>
    %113 = tpu.matmul %111, %112, %cst_88 {dimension_numbers = #tpu.dot_dimension_numbers<[1], [0], [0], [1], [0, 0, 1, 1], [], []>} : vector<64x32xbf16>, vector<32x128xbf16>, vector<64x128xf32> -> vector<64x128xf32>
    %c0_89 = arith.constant 0 : index
    %c0_90 = arith.constant 0 : index
    %114 = vector.load %arg7[%c0_89, %c0_90] : memref<1x128xf32, #tpu.memory_space<vmem>>, vector<1x128xf32>
    %115 = vector.broadcast %114 : vector<1x128xf32> to vector<64x128xf32>
    %116 = arith.addf %113, %115 : vector<64x128xf32>
    %117 = arith.addf %116, %1 : vector<64x128xf32>
    %cst_91 = arith.constant 0.000000e+00 : f32
    %118 = vector.broadcast %cst_91 : f32 to vector<64x128xf32>
    %119 = arith.maximumf %117, %118 : vector<64x128xf32>
    %c0_92 = arith.constant 0 : index
    %c0_93 = arith.constant 0 : index
    %c0_94 = arith.constant 0 : index
    %120 = vector.load %arg9[%c0_92, %c0_93, %c0_94] : memref<1x64x128xf32, #tpu.memory_space<vmem>>, vector<1x64x128xf32>
    %121 = vector.shape_cast %120 : vector<1x64x128xf32> to vector<64x128xf32>
    %122 = vector.shape_cast %119 : vector<64x128xf32> to vector<1x64x128xf32>
    tpu.vector_store %arg9[%c0_92, %c0_93, %c0_94], %122 {strides = array<i32>} : memref<1x64x128xf32, #tpu.memory_space<vmem>>, vector<1x64x128xf32>,
    return
  }
  func.func @transform_0(%arg0: i32) -> (i32, i32, i32) {
    %c0_i32 = arith.constant 0 : i32
    %c0_i32_0 = arith.constant 0 : i32
    %c0_i32_1 = arith.constant 0 : i32
    return %arg0, %c0_i32, %c0_i32_0 : i32, i32, i32
  }
  func.func @transform_1(%arg0: i32) -> (i32, i32) {
    %c0_i32 = arith.constant 0 : i32
    %c0_i32_0 = arith.constant 0 : i32
    %c0_i32_1 = arith.constant 0 : i32
    return %c0_i32, %c0_i32_0 : i32, i32
  }
  func.func @transform_2(%arg0: i32) -> (i32, i32) {
    %c0_i32 = arith.constant 0 : i32
    %c0_i32_0 = arith.constant 0 : i32
    %c0_i32_1 = arith.constant 0 : i32
    return %c0_i32, %c0_i32_0 : i32, i32
  }
  func.func @transform_3(%arg0: i32) -> (i32, i32, i32) {
    %c0_i32 = arith.constant 0 : i32
    %c0_i32_0 = arith.constant 0 : i32
    %c0_i32_1 = arith.constant 0 : i32
    %c0_i32_2 = arith.constant 0 : i32
    return %c0_i32, %c0_i32_0, %c0_i32_1 : i32, i32, i32
  }
  func.func @transform_4(%arg0: i32) -> (i32, i32) {
    %c0_i32 = arith.constant 0 : i32
    %c0_i32_0 = arith.constant 0 : i32
    %c0_i32_1 = arith.constant 0 : i32
    return %c0_i32, %c0_i32_0 : i32, i32
  }
  func.func @transform_5(%arg0: i32) -> (i32, i32) {
    %c0_i32 = arith.constant 0 : i32
    %c0_i32_0 = arith.constant 0 : i32
    %c0_i32_1 = arith.constant 0 : i32
    return %c0_i32, %c0_i32_0 : i32, i32
  }
  func.func @transform_6(%arg0: i32) -> (i32, i32) {
    %c0_i32 = arith.constant 0 : i32
    %c0_i32_0 = arith.constant 0 : i32
    %c0_i32_1 = arith.constant 0 : i32
    return %c0_i32, %c0_i32_0 : i32, i32
  }
  func.func @transform_7(%arg0: i32) -> (i32, i32, i32) {
    %c0_i32 = arith.constant 0 : i32
    %c0_i32_0 = arith.constant 0 : i32
    %c0_i32_1 = arith.constant 0 : i32
    %c0_i32_2 = arith.constant 0 : i32
    return %c0_i32, %c0_i32_0, %c0_i32_1 : i32, i32, i32
  }
  func.func @transform_8(%arg0: i32) -> (i32, i32, i32) {
    %c0_i32 = arith.constant 0 : i32
    %c0_i32_0 = arith.constant 0 : i32
    %c0_i32_1 = arith.constant 0 : i32
    return %arg0, %c0_i32, %c0_i32_0 : i32, i32, i32
  }
}

</mosaic_0001>

<llo_original>
// kernel: bottleneck_forward.1
$region0: #{bottleneck_forward.1}
  #allocation0 [shape = 'u32[]', space=smem, size = 0x4, offset = 0x4, fixed_abs, tag = 'smem constant byte address 0x4 - core index']
  #allocation1 [shape = 'u32[72,128]{1,0:T(1,128)}', space=vmem, size = 0x9000, scoped, tag = 'internal scratch']
  #allocation2 [shape = 'f32[82,32]{1,0:T(8,128)}', space=vmem, size = 0xb000, scoped, tag = 'scratch operand']
  %s0 = inlined_call_operand.vmem [shape: f32[2,64,128], index: 0, kind: input, shape index: {}]
  %s1 = inlined_call_operand.vmem [shape: bf16[128,32], index: 1, kind: input, shape index: {}]
  %s2 = inlined_call_operand.vmem [shape: f32[1,32], index: 2, kind: input, shape index: {}]
  %s3 = inlined_call_operand.vmem [shape: bf16[9,32,32], index: 3, kind: input, shape index: {}]
  %s4 = inlined_call_operand.vmem [shape: f32[1,32], index: 4, kind: input, shape index: {}]
  %s5 = inlined_call_operand.vmem [shape: bf16[32,128], index: 5, kind: input, shape index: {}]
  %s6 = inlined_call_operand.vmem [shape: f32[1,128], index: 6, kind: input, shape index: {}]
  %s7 = inlined_call_operand.vmem [shape: f32[9,64,1], index: 7, kind: input, shape index: {}]
  %s8 = inlined_call_operand.hbm [shape: f32[2,64,128], index: 8, kind: output, shape index: {}]
  %s9 = sld [smem:[#allocation0]]
  $region65: #{bottleneck_forward.1} parent=0
    _
  %s11 = ssub.s32 1, %s9
  %s12 = scalar_select 0, %s11, %s9
  $region1: #{bottleneck_forward.1} parent=0
    #allocation3 [shape = 'u8[65536]{0}', space=vmem, size = 0x10000, scoped, tag = 'output window, operand 0']
    #allocation4 [shape = 's32[2]{0}', space=sflag, size = 0x8, scoped, tag = 'scoped memory for bottleneck_forward.1']
    %13 = vsyncpa [#allocation4], 0
    %s14 = scalar_lea.sflag [#allocation4], 1
    %15 = vsyncpa %s14, 0
    loop: start=0, step=1, limit=4
    $region2: #{bottleneck_forward.1} parent=1 // loop_pre_header
      _
    $region3: #{bottleneck_forward.1} parent=1 // loop_header
      %s17 = sphi 0, %s21
      %p18 = scmp.ge.s32.totalorder %s17, 4
      %s27 = sphi 0, %s29
      %s30 = sphi 0, %s27
      %s31 = sphi 0, %s30
      %s47 = sphi 0, %s31
      %s51 = sphi 0, %s51
      %s53 = sphi 0, %s51
      %s54 = sphi 0, %s53
      %s68 = sphi 0, %s54
      %s72 = sphi 0, %s72
      %s74 = sphi 0, %s72
      %s75 = sphi 0, %s74
      %s89 = sphi 0, %s75
      %s93 = sphi 0, %s93
      %s95 = sphi 0, %s93
      %s96 = sphi 0, %s95
      %s110 = sphi 0, %s96
      %s114 = sphi 0, %s114
      %s116 = sphi 0, %s114
      %s117 = sphi 0, %s116
      %s131 = sphi 0, %s117
      %s135 = sphi 0, %s135
      %s137 = sphi 0, %s135
      %s138 = sphi 0, %s137
      %s152 = sphi 0, %s138
      %s156 = sphi 0, %s156
      %s158 = sphi 0, %s156
      %s159 = sphi 0, %s158
      %s173 = sphi 0, %s159
      %s177 = sphi 0, %s177
      %s179 = sphi 0, %s177
      %s180 = sphi 0, %s179
      %s194 = sphi 0, %s180
      %s200 = sphi 0, %s202
      %s203 = sphi 0, %s200
      %s204 = sphi 0, %s203
      %s220 = sphi 0, %s204
    $region4: #{bottleneck_forward.1} parent=1 // loop_header_branch
      %20 = sbr.rel (%p18) target = $region8
    $region5: #{bottleneck_forward.1} parent=1 // loop_body
      %s22 = ssub.s32 %s17, 1
      %s23 = ssub.s32 %s17, 2
      %s24 = sadd.s32 %s17, 1
      %s25 = ssub.s32 %s17, %s24
      %p26 = scmp.eq.s32.totalorder %s25, 0
      %s28 = sadd.s32 %s27, 1
      %s29 = scalar_select %p26, %s27, %s28
      %p32 = pneg %p26
      %p33 = scmp.eq.s32.totalorder %s17, 1
      %p34 = por %p32, %p33
      %p35 = scmp.ne.s32.totalorder %s27, %s30
      %p36 = scmp.eq.s32.totalorder %s17, 0
      %p37 = por %p35, %p36
      %p38 = scmp.ne.s32.totalorder %s27, %s30
      %p39 = scmp.eq.s32.totalorder %s22, 1
      %p40 = por %p38, %p39
      %p41 = scmp.ne.s32.totalorder %s30, %s31
      %p42 = scmp.eq.s32.totalorder %s22, 0
      %p43 = por %p41, %p42
      %p44 = scmp.ne.s32.totalorder %s30, %s31
      %p45 = scmp.eq.s32.totalorder %s23, 1
      %p46 = por %p44, %p45
      %p48 = scmp.ne.s32.totalorder %s31, %s47
      %p49 = scmp.eq.s32.totalorder %s23, 0
      %p50 = por %p48, %p49
      %s52 = sadd.s32 %s51, 1
      %p55 = scmp.eq.s32.totalorder %s17, 1
      %p56 = scmp.ne.s32.totalorder %s51, %s53
      %p57 = scmp.eq.s32.totalorder %s17, 0
      %p58 = por %p56, %p57
      %p59 = scmp.ne.s32.totalorder %s51, %s53
      %p60 = scmp.eq.s32.totalorder %s22, 1
      %p61 = por %p59, %p60
      %p62 = scmp.ne.s32.totalorder %s53, %s54
      %p63 = scmp.eq.s32.totalorder %s22, 0
      %p64 = por %p62, %p63
      %p65 = scmp.ne.s32.totalorder %s53, %s54
      %p66 = scmp.eq.s32.totalorder %s23, 1
      %p67 = por %p65, %p66
      %p69 = scmp.ne.s32.totalorder %s54, %s68
      %p70 = scmp.eq.s32.totalorder %s23, 0
      %p71 = por %p69, %p70
      %s73 = sadd.s32 %s72, 1
      %p76 = scmp.eq.s32.totalorder %s17, 1
      %p77 = scmp.ne.s32.totalorder %s72, %s74
      %p78 = scmp.eq.s32.totalorder %s17, 0
      %p79 = por %p77, %p78
      %p80 = scmp.ne.s32.totalorder %s72, %s74
      %p81 = scmp.eq.s32.totalorder %s22, 1
      %p82 = por %p80, %p81
      %p83 = scmp.ne.s32.totalorder %s74, %s75
      %p84 = scmp.eq.s32.totalorder %s22, 0
      %p85 = por %p83, %p84
      %p86 = scmp.ne.s32.totalorder %s74, %s75
      %p87 = scmp.eq.s32.totalorder %s23, 1
      %p88 = por %p86, %p87
      %p90 = scmp.ne.s32.totalorder %s75, %s89
      %p91 = scmp.eq.s32.totalorder %s23, 0
      %p92 = por %p90, %p91
      %s94 = sadd.s32 %s93, 1
      %p97 = scmp.eq.s32.totalorder %s17, 1
      %p98 = scmp.ne.s32.totalorder %s93, %s95
      %p99 = scmp.eq.s32.totalorder %s17, 0
      %p100 = por %p98, %p99
      %p101 = scmp.ne.s32.totalorder %s93, %s95
      %p102 = scmp.eq.s32.totalorder %s22, 1
      %p103 = por %p101, %p102
      %p104 = scmp.ne.s32.totalorder %s95, %s96
      %p105 = scmp.eq.s32.totalorder %s22, 0
      %p106 = por %p104, %p105
      %p107 = scmp.ne.s32.totalorder %s95, %s96
      %p108 = scmp.eq.s32.totalorder %s23, 1
      %p109 = por %p107, %p108
      %p111 = scmp.ne.s32.totalorder %s96, %s110
      %p112 = scmp.eq.s32.totalorder %s23, 0
      %p113 = por %p111, %p112
      %s115 = sadd.s32 %s114, 1
      %p118 = scmp.eq.s32.totalorder %s17, 1
      %p119 = scmp.ne.s32.totalorder %s114, %s116
      %p120 = scmp.eq.s32.totalorder %s17, 0
      %p121 = por %p119, %p120
      %p122 = scmp.ne.s32.totalorder %s114, %s116
      %p123 = scmp.eq.s32.totalorder %s22, 1
      %p124 = por %p122, %p123
      %p125 = scmp.ne.s32.totalorder %s116, %s117
      %p126 = scmp.eq.s32.totalorder %s22, 0
      %p127 = por %p125, %p126
      %p128 = scmp.ne.s32.totalorder %s116, %s117
      %p129 = scmp.eq.s32.totalorder %s23, 1
      %p130 = por %p128, %p129
      %p132 = scmp.ne.s32.totalorder %s117, %s131
      %p133 = scmp.eq.s32.totalorder %s23, 0
      %p134 = por %p132, %p133
      %s136 = sadd.s32 %s135, 1
      %p139 = scmp.eq.s32.totalorder %s17, 1
      %p140 = scmp.ne.s32.totalorder %s135, %s137
      %p141 = scmp.eq.s32.totalorder %s17, 0
      %p142 = por %p140, %p141
      %p143 = scmp.ne.s32.totalorder %s135, %s137
      %p144 = scmp.eq.s32.totalorder %s22, 1
      %p145 = por %p143, %p144
      %p146 = scmp.ne.s32.totalorder %s137, %s138
      %p147 = scmp.eq.s32.totalorder %s22, 0
      %p148 = por %p146, %p147
      %p149 = scmp.ne.s32.totalorder %s137, %s138
      %p150 = scmp.eq.s32.totalorder %s23, 1
      %p151 = por %p149, %p150
      %p153 = scmp.ne.s32.totalorder %s138, %s152
      %p154 = scmp.eq.s32.totalorder %s23, 0
      %p155 = por %p153, %p154
      %s157 = sadd.s32 %s156, 1
      %p160 = scmp.eq.s32.totalorder %s17, 1
      %p161 = scmp.ne.s32.totalorder %s156, %s158
      %p162 = scmp.eq.s32.totalorder %s17, 0
      %p163 = por %p161, %p162
      %p164 = scmp.ne.s32.totalorder %s156, %s158
      %p165 = scmp.eq.s32.totalorder %s22, 1
      %p166 = por %p164, %p165
      %p167 = scmp.ne.s32.totalorder %s158, %s159
      %p168 = scmp.eq.s32.totalorder %s22, 0
      %p169 = por %p167, %p168
      %p170 = scmp.ne.s32.totalorder %s158, %s159
      %p171 = scmp.eq.s32.totalorder %s23, 1
      %p172 = por %p170, %p171
      %p174 = scmp.ne.s32.totalorder %s159, %s173
      %p175 = scmp.eq.s32.totalorder %s23, 0
      %p176 = por %p174, %p175
      %s178 = sadd.s32 %s177, 1
      %p181 = scmp.eq.s32.totalorder %s17, 1
      %p182 = scmp.ne.s32.totalorder %s177, %s179
      %p183 = scmp.eq.s32.totalorder %s17, 0
      %p184 = por %p182, %p183
      %p185 = scmp.ne.s32.totalorder %s177, %s179
      %p186 = scmp.eq.s32.totalorder %s22, 1
      %p187 = por %p185, %p186
      %p188 = scmp.ne.s32.totalorder %s179, %s180
      %p189 = scmp.eq.s32.totalorder %s22, 0
      %p190 = por %p188, %p189
      %p191 = scmp.ne.s32.totalorder %s179, %s180
      %p192 = scmp.eq.s32.totalorder %s23, 1
      %p193 = por %p191, %p192
      %p195 = scmp.ne.s32.totalorder %s180, %s194
      %p196 = scmp.eq.s32.totalorder %s23, 0
      %p197 = por %p195, %p196
      %s198 = ssub.s32 %s17, %s24
      %p199 = scmp.eq.s32.totalorder %s198, 0
      %s201 = sadd.s32 %s200, 1
      %s202 = scalar_select %p199, %s200, %s201
      %p205 = pneg %p199
      %p206 = scmp.eq.s32.totalorder %s17, 1
      %p207 = por %p205, %p206
      %p208 = scmp.ne.s32.totalorder %s200, %s203
      %p209 = scmp.eq.s32.totalorder %s17, 0
      %p210 = por %p208, %p209
      %p211 = scmp.ne.s32.totalorder %s200, %s203
      %p212 = scmp.eq.s32.totalorder %s22, 1
      %p213 = por %p211, %p212
      %p214 = scmp.ne.s32.totalorder %s203, %s204
      %p215 = scmp.eq.s32.totalorder %s22, 0
      %p216 = por %p214, %p215
      %p217 = scmp.ne.s32.totalorder %s203, %s204
      %p218 = scmp.eq.s32.totalorder %s23, 1
      %p219 = por %p217, %p218
      %p221 = scmp.ne.s32.totalorder %s204, %s220
      %p222 = scmp.eq.s32.totalorder %s23, 0
      %p223 = por %p221, %p222
      %p224 = scmp.le.s32.totalorder 1, %s17
      %p225 = scmp.lt.s32.totalorder %s17, 3
      %p226 = pnand %p224, %p225
      %p227 = pneg %p226
      // Predicated region
      $region9: #{bottleneck_forward.1} parent=5 // pred_check
        _
      $region10: #{bottleneck_forward.1} parent=5 // pred_check_branch
        %229 = sbr.rel (%p226) target = $region12
      $region11: #{bottleneck_forward.1} parent=5 // pred_region
        %s230 = ssub.s32 %s17, 1
        // Predicated region
        $region13: #{bottleneck_forward.1} parent=11 // pred_check
          %p231 = pneg %p64
        $region14: #{bottleneck_forward.1} parent=11 // pred_check_branch
          %233 = sbr.rel (%p231) target = $region16
        $region15: #{bottleneck_forward.1} parent=11 // pred_region
          _
        $region16: #{bottleneck_forward.1} parent=11 // pred_fallthru
          _
        // Predicated region
        $region17: #{bottleneck_forward.1} parent=11 // pred_check
          %p234 = pneg %p85
        $region18: #{bottleneck_forward.1} parent=11 // pred_check_branch
          %236 = sbr.rel (%p234) target = $region20
        $region19: #{bottleneck_forward.1} parent=11 // pred_region
          _
        $region20: #{bottleneck_forward.1} parent=11 // pred_fallthru
          _
        // Predicated region
        $region21: #{bottleneck_forward.1} parent=11 // pred_check
          %p237 = pneg %p106
        $region22: #{bottleneck_forward.1} parent=11 // pred_check_branch
          %239 = sbr.rel (%p237) target = $region24
        $region23: #{bottleneck_forward.1} parent=11 // pred_region
          _
        $region24: #{bottleneck_forward.1} parent=11 // pred_fallthru
          _
        // Predicated region
        $region25: #{bottleneck_forward.1} parent=11 // pred_check
          %p240 = pneg %p127
        $region26: #{bottleneck_forward.1} parent=11 // pred_check_branch
          %242 = sbr.rel (%p240) target = $region28
        $region27: #{bottleneck_forward.1} parent=11 // pred_region
          _
        $region28: #{bottleneck_forward.1} parent=11 // pred_fallthru
          _
        // Predicated region
        $region29: #{bottleneck_forward.1} parent=11 // pred_check
          %p243 = pneg %p148
        $region30: #{bottleneck_forward.1} parent=11 // pred_check_branch
          %245 = sbr.rel (%p243) target = $region32
        $region31: #{bottleneck_forward.1} parent=11 // pred_region
          _
        $region32: #{bottleneck_forward.1} parent=11 // pred_fallthru
          _
        // Predicated region
        $region33: #{bottleneck_forward.1} parent=11 // pred_check
          %p246 = pneg %p169
        $region34: #{bottleneck_forward.1} parent=11 // pred_check_branch
          %248 = sbr.rel (%p246) target = $region36
        $region35: #{bottleneck_forward.1} parent=11 // pred_region
          _
        $region36: #{bottleneck_forward.1} parent=11 // pred_fallthru
          _
        // Predicated region
        $region37: #{bottleneck_forward.1} parent=11 // pred_check
          %p249 = pneg %p190
        $region38: #{bottleneck_forward.1} parent=11 // pred_check_branch
          %251 = sbr.rel (%p249) target = $region40
        $region39: #{bottleneck_forward.1} parent=11 // pred_region
          _
        $region40: #{bottleneck_forward.1} parent=11 // pred_fallthru
          _
      $region12: #{bottleneck_forward.1} parent=5 // pred_fallthru
        _
      %p252 = scmp.lt.s32.totalorder %s17, 2
      // Predicated region
      $region41: #{bottleneck_forward.1} parent=5 // pred_check
        %p253 = pneg %p252
      $region42: #{bottleneck_forward.1} parent=5 // pred_check_branch
        %255 = sbr.rel (%p253) target = $region44
      $region43: #{bottleneck_forward.1} parent=5 // pred_region
        // Predicated region
        $region45: #{bottleneck_forward.1} parent=43 // pred_check
          %p256 = pneg %p37
        $region46: #{bottleneck_forward.1} parent=43 // pred_check_branch
          %258 = sbr.rel (%p256) target = $region48
        $region47: #{bottleneck_forward.1} parent=43 // pred_region
          %p259 = scmp.lt.s32.totalorder %s17, 1
          %s260 = scalar_select %p259, %s17, 1
          %s261 = smul.addr %s260, 8
          %s262 = smul.addr %s261, 8
          %s263 = scalar_lea.vmem %s0, %s262
        $region48: #{bottleneck_forward.1} parent=43 // pred_fallthru
          _
      $region44: #{bottleneck_forward.1} parent=5 // pred_fallthru
        _
      %p264 = scmp.le.s32.totalorder 1, %s17
      %p265 = scmp.lt.s32.totalorder %s17, 3
      %p266 = pnand %p264, %p265
      %p267 = pneg %p266
      // Predicated region
      $region49: #{bottleneck_forward.1} parent=5 // pred_check
        _
      $region50: #{bottleneck_forward.1} parent=5 // pred_check_branch
        %269 = sbr.rel (%p266) target = $region52
      $region51: #{bottleneck_forward.1} parent=5 // pred_region
        %s270 = ssub.s32 %s17, 1
        %p271 = scmp.lt.s32.totalorder %s22, 1
        %s272 = scalar_select %p271, %s22, 1
        %s273 = smul.addr %s272, 8
        %s274 = smul.addr %s273, 8
        %s275 = scalar_lea.vmem %s0, %s274
        %p276 = pneg %p43
        %p277 = pneg %p40
        %p278 = pneg %p64
        %p279 = pneg %p61
        %p280 = pneg %p85
        %p281 = pneg %p82
        %p282 = pneg %p106
        %p283 = pneg %p103
        %p284 = pneg %p127
        %p285 = pneg %p124
        %p286 = pneg %p148
        %p287 = pneg %p145
        %p288 = pneg %p169
        %p289 = pneg %p166
        %p290 = pneg %p190
        %p291 = pneg %p187
        %p292 = pneg %p216
        %p293 = pneg %p213
        %s294 = sand.u32 %s203, 1
        %s295 = scalar_lea.sflag [#allocation4], %s294
        %s296 = sand.u32 %s203, 1
        %s297 = smul.addr %s296, 64
        %s298 = scalar_lea.vmem [#allocation3], %s297
        %p299 = scmp.lt.s32.totalorder %s22, 1
        %s300 = scalar_select %p299, %s22, 1
        %s301 = smul.addr %s300, 8
        %s302 = smul.addr %s301, 8
        %s303 = scalar_lea.vmem %s0, %s302
        %v305 = vld [vmem:[%s303] sm:$0xff]
        %v306 = vld [vmem:[%s303 + $0x8] sm:$0xff]
        %v307 = vld [vmem:[%s303 + $0x10] sm:$0xff]
        %v308 = vld [vmem:[%s303 + $0x18] sm:$0xff]
        %v309 = vld [vmem:[%s303 + $0x20] sm:$0xff]
        %v310 = vld [vmem:[%s303 + $0x28] sm:$0xff]
        %v311 = vld [vmem:[%s303 + $0x30] sm:$0xff]
        %v312 = vld [vmem:[%s303 + $0x38] sm:$0xff]
        %v313 = vpack.c.bf16 %v306, %v305
        %v314 = vpack.c.bf16 %v308, %v307
        %v315 = vpack.c.bf16 %v310, %v309
        %v316 = vpack.c.bf16 %v312, %v311
        %v317 = vld [vmem:[%s1] sm:$0xf]
        %v318 = vld [vmem:[%s1 + $0x4] sm:$0xf]
        %v319 = vld [vmem:[%s1 + $0x8] sm:$0xf]
        %v320 = vld [vmem:[%s1 + $0xc] sm:$0xf]
        %v321 = vld [vmem:[%s1 + $0x10] sm:$0xf]
        %v322 = vld [vmem:[%s1 + $0x14] sm:$0xf]
        %v323 = vld [vmem:[%s1 + $0x18] sm:$0xf]
        %v324 = vld [vmem:[%s1 + $0x1c] sm:$0xf]
        %v325 = vld [vmem:[%s1 + $0x20] sm:$0xf]
        %v326 = vld [vmem:[%s1 + $0x24] sm:$0xf]
        %v327 = vld [vmem:[%s1 + $0x28] sm:$0xf]
        %v328 = vld [vmem:[%s1 + $0x2c] sm:$0xf]
        %v329 = vld [vmem:[%s1 + $0x30] sm:$0xf]
        %v330 = vld [vmem:[%s1 + $0x34] sm:$0xf]
        %v331 = vld [vmem:[%s1 + $0x38] sm:$0xf]
        %v332 = vld [vmem:[%s1 + $0x3c] sm:$0xf]
        %v333 = vld [vmem:[%s2] sm:$0x1]
        %v335 = vperm.slane %v333, 0
        %v353 = vunpack.c.l.b16 %v317
        %v354 = vunpack.c.l.b16 %v318
        %v355 = vunpack.c.l.b16 %v319
        %v356 = vunpack.c.l.b16 %v320
        %v357 = vunpack.c.l.b16 %v321
        %v358 = vunpack.c.l.b16 %v322
        %v359 = vunpack.c.l.b16 %v323
        %v360 = vunpack.c.l.b16 %v324
        %v361 = vunpack.c.l.b16 %v325
        %v362 = vunpack.c.l.b16 %v326
        %v363 = vunpack.c.l.b16 %v327
        %v364 = vunpack.c.l.b16 %v328
        %v365 = vunpack.c.l.b16 %v329
        %v366 = vunpack.c.l.b16 %v330
        %v367 = vunpack.c.l.b16 %v331
        %v368 = vunpack.c.l.b16 %v332
        %v369 = vpack.c.b16 %v354, %v353
        %v370 = vpack.c.b16 %v356, %v355
        %v371 = vpack.c.b16 %v358, %v357
        %v372 = vpack.c.b16 %v360, %v359
        %v373 = vpack.c.b16 %v362, %v361
        %v374 = vpack.c.b16 %v364, %v363
        %v375 = vpack.c.b16 %v366, %v365
        %v376 = vpack.c.b16 %v368, %v367
        %385 = vmatpush.bf16.msra.mxu0 %v376
        %386 = vmatpush.bf16.msra.mxu0 %v375
        %387 = vmatpush.bf16.msra.mxu0 %v374
        %388 = vmatpush.bf16.msra.mxu0 %v373
        %389 = vmatpush.bf16.msra.mxu0 %v372
        %390 = vmatpush.bf16.msra.mxu0 %v371
        %391 = vmatpush.bf16.msra.mxu0 %v370
        %392 = vmatpush.bf16.msra.mxu0 %v369
        %393 = vmatmul.bf16.gmra.mxu0 %v313
        %v394 = vpop.f32.mrf.mxu0
        %v395 = vadd.f32 %v335, %v394
        %v396 = vpop.f32.mrf.mxu0
        %v397 = vadd.f32 %v335, %v396
        %398 = vmatmul.bf16.gmra.mxu0 %v314
        %v399 = vpop.f32.mrf.mxu0
        %v400 = vadd.f32 %v335, %v399
        %v401 = vpop.f32.mrf.mxu0
        %v402 = vadd.f32 %v335, %v401
        %403 = vmatmul.bf16.gmra.mxu0 %v315
        %v404 = vpop.f32.mrf.mxu0
        %v405 = vadd.f32 %v335, %v404
        %v406 = vpop.f32.mrf.mxu0
        %v407 = vadd.f32 %v335, %v406
        %408 = vmatmul.bf16.gmra.mxu0 %v316
        %v409 = vpop.f32.mrf.mxu0
        %v410 = vadd.f32 %v335, %v409
        %v411 = vpop.f32.mrf.mxu0
        %v412 = vadd.f32 %v335, %v411
        %413 = vdwg.mxu0
        %v414 = vmax.f32 %v395, 0.0
        %v415 = vmax.f32 %v397, 0.0
        %v416 = vmax.f32 %v400, 0.0
        %v417 = vmax.f32 %v402, 0.0
        %v418 = vmax.f32 %v405, 0.0
        %v419 = vmax.f32 %v407, 0.0
        %v420 = vmax.f32 %v410, 0.0
        %v421 = vmax.f32 %v412, 0.0
        %vm422 = vcmask 261120
        %423 = vst.msk [vmem:[#allocation2] sm:$0xff] %vm422, 0.0
        %vm424 = vcmask 253952
        %425 = vst.msk [vmem:[#allocation2 + $0x8] sm:$0x1] %vm424, 0.0
        %426 = vst.msk [vmem:[#allocation2 + $0x49] sm:$0xff] %vm422, 0.0
        %427 = vst.msk [vmem:[#allocation2 + $0x51] sm:$0x1] %vm424, 0.0
        %428 = vst.msk [vmem:[#allocation2 + $0x9] sm:$0xff] %vm422, %v414
        %429 = vst.msk [vmem:[#allocation2 + $0x11] sm:$0xff] %vm422, %v415
        %430 = vst.msk [vmem:[#allocation2 + $0x19] sm:$0xff] %vm422, %v416
        %431 = vst.msk [vmem:[#allocation2 + $0x21] sm:$0xff] %vm422, %v417
        %432 = vst.msk [vmem:[#allocation2 + $0x29] sm:$0xff] %vm422, %v418
        %433 = vst.msk [vmem:[#allocation2 + $0x31] sm:$0xff] %vm422, %v419
        %434 = vst.msk [vmem:[#allocation2 + $0x39] sm:$0xff] %vm422, %v420
        %435 = vst.msk [vmem:[#allocation2 + $0x41] sm:$0xff] %vm422, %v421
        %v436 = vld [vmem:[#allocation2] sm:$0xff]
        %v437 = vld [vmem:[#allocation2 + $0x8] sm:$0xff]
        %v438 = vld [vmem:[#allocation2 + $0x10] sm:$0xff]
        %v439 = vld [vmem:[#allocation2 + $0x18] sm:$0xff]
        %v440 = vld [vmem:[#allocation2 + $0x20] sm:$0xff]
        %v441 = vld [vmem:[#allocation2 + $0x28] sm:$0xff]
        %v442 = vld [vmem:[#allocation2 + $0x30] sm:$0xff]
        %v443 = vld [vmem:[#allocation2 + $0x38] sm:$0xff]
        %v444 = vld [vmem:[%s7] sm:$0xff]
        %v445 = vld [vmem:[%s7 + $0x8] sm:$0xff]
        %v446 = vld [vmem:[%s7 + $0x10] sm:$0xff]
        %v447 = vld [vmem:[%s7 + $0x18] sm:$0xff]
        %v448 = vld [vmem:[%s7 + $0x20] sm:$0xff]
        %v449 = vld [vmem:[%s7 + $0x28] sm:$0xff]
        %v450 = vld [vmem:[%s7 + $0x30] sm:$0xff]
        %v451 = vld [vmem:[%s7 + $0x38] sm:$0xff]
        %453 = vset.pattern.permute.xlu0 0
        %454 = vperm.xlu0 %453, %v444
        %v455 = vpop.permute.xlu0 %454
        %458 = vset.pattern.permute.xlu0 0
        %459 = vperm.xlu0 %458, %v445
        %v460 = vpop.permute.xlu0 %459
        %463 = vset.pattern.permute.xlu0 0
        %464 = vperm.xlu0 %463, %v446
        %v465 = vpop.permute.xlu0 %464
        %468 = vset.pattern.permute.xlu0 0
        %469 = vperm.xlu0 %468, %v447
        %v470 = vpop.permute.xlu0 %469
        %473 = vset.pattern.permute.xlu0 0
        %474 = vperm.xlu0 %473, %v448
        %v475 = vpop.permute.xlu0 %474
        %478 = vset.pattern.permute.xlu0 0
        %479 = vperm.xlu0 %478, %v449
        %v480 = vpop.permute.xlu0 %479
        %483 = vset.pattern.permute.xlu0 0
        %484 = vperm.xlu0 %483, %v450
        %v485 = vpop.permute.xlu0 %484
        %488 = vset.pattern.permute.xlu0 0
        %489 = vperm.xlu0 %488, %v451
        %v490 = vpop.permute.xlu0 %489
        %v492 = vmul.f32 %v436, %v455
        %v493 = vmul.f32 %v437, %v460
        %v494 = vmul.f32 %v438, %v465
        %v495 = vmul.f32 %v439, %v470
        %v496 = vmul.f32 %v440, %v475
        %v497 = vmul.f32 %v441, %v480
        %v498 = vmul.f32 %v442, %v485
        %v499 = vmul.f32 %v443, %v490
        %v500 = vpack.c.bf16 %v493, %v492
        %v501 = vpack.c.bf16 %v495, %v494
        %v502 = vpack.c.bf16 %v497, %v496
        %v503 = vpack.c.bf16 %v499, %v498
        %v504 = vld [vmem:[%s3] sm:$0xf]
        %v505 = vld [vmem:[%s3 + $0x4] sm:$0xf]
        %v506 = vld [vmem:[%s3 + $0x8] sm:$0xf]
        %v507 = vld [vmem:[%s3 + $0xc] sm:$0xf]
        %v508 = vld [vmem:[#allocation2 + $0x1] sm:$0xff]
        %v509 = vld [vmem:[#allocation2 + $0x9] sm:$0xff]
        %v510 = vld [vmem:[#allocation2 + $0x11] sm:$0xff]
        %v511 = vld [vmem:[#allocation2 + $0x19] sm:$0xff]
        %v512 = vld [vmem:[#allocation2 + $0x21] sm:$0xff]
        %v513 = vld [vmem:[#allocation2 + $0x29] sm:$0xff]
        %v514 = vld [vmem:[#allocation2 + $0x31] sm:$0xff]
        %v515 = vld [vmem:[#allocation2 + $0x39] sm:$0xff]
        %s516 = scalar_lea.vmem %s7, 64
        %v517 = vld [vmem:[%s516] sm:$0xff]
        %v518 = vld [vmem:[%s516 + $0x8] sm:$0xff]
        %v519 = vld [vmem:[%s516 + $0x10] sm:$0xff]
        %v520 = vld [vmem:[%s516 + $0x18] sm:$0xff]
        %v521 = vld [vmem:[%s516 + $0x20] sm:$0xff]
        %v522 = vld [vmem:[%s516 + $0x28] sm:$0xff]
        %v523 = vld [vmem:[%s516 + $0x30] sm:$0xff]
        %v524 = vld [vmem:[%s516 + $0x38] sm:$0xff]
        %526 = vset.pattern.permute.xlu0 0
        %527 = vperm.xlu0 %526, %v517
        %v528 = vpop.permute.xlu0 %527
        %531 = vset.pattern.permute.xlu0 0
        %532 = vperm.xlu0 %531, %v518
        %v533 = vpop.permute.xlu0 %532
        %536 = vset.pattern.permute.xlu0 0
        %537 = vperm.xlu0 %536, %v519
        %v538 = vpop.permute.xlu0 %537
        %541 = vset.pattern.permute.xlu0 0
        %542 = vperm.xlu0 %541, %v520
        %v543 = vpop.permute.xlu0 %542
        %546 = vset.pattern.permute.xlu0 0
        %547 = vperm.xlu0 %546, %v521
        %v548 = vpop.permute.xlu0 %547
        %551 = vset.pattern.permute.xlu0 0
        %552 = vperm.xlu0 %551, %v522
        %v553 = vpop.permute.xlu0 %552
        %556 = vset.pattern.permute.xlu0 0
        %557 = vperm.xlu0 %556, %v523
        %v558 = vpop.permute.xlu0 %557
        %561 = vset.pattern.permute.xlu0 0
        %562 = vperm.xlu0 %561, %v524
        %v563 = vpop.permute.xlu0 %562
        %v565 = vmul.f32 %v508, %v528
        %v566 = vmul.f32 %v509, %v533
        %v567 = vmul.f32 %v510, %v538
        %v568 = vmul.f32 %v511, %v543
        %v569 = vmul.f32 %v512, %v548
        %v570 = vmul.f32 %v513, %v553
        %v571 = vmul.f32 %v514, %v558
        %v572 = vmul.f32 %v515, %v563
        %v573 = vpack.c.bf16 %v566, %v565
        %v574 = vpack.c.bf16 %v568, %v567
        %v575 = vpack.c.bf16 %v570, %v569
        %v576 = vpack.c.bf16 %v572, %v571
        %s577 = scalar_lea.vmem %s3, 16
        %v578 = vld [vmem:[%s577] sm:$0xf]
        %v579 = vld [vmem:[%s577 + $0x4] sm:$0xf]
        %v580 = vld [vmem:[%s577 + $0x8] sm:$0xf]
        %v581 = vld [vmem:[%s577 + $0xc] sm:$0xf]
        %v586 = vunpack.c.l.b16 %v578
        %v587 = vunpack.c.l.b16 %v579
        %v588 = vunpack.c.l.b16 %v580
        %v589 = vunpack.c.l.b16 %v581
        %v590 = vpack.c.b16 %v587, %v586
        %v591 = vpack.c.b16 %v589, %v588
        %v595 = vsel %vm422, %v573, 0
        %v598 = vsel %vm422, %v574, 0
        %v601 = vsel %vm422, %v575, 0
        %v604 = vsel %vm422, %v576, 0
        %606 = vmatpush.bf16.msra.mxu0 0
        %607 = vmatpush.bf16.msra.mxu0 0
        %608 = vmatpush.bf16.msra.mxu0 0
        %609 = vmatpush.bf16.msra.mxu0 0
        %610 = vmatpush.bf16.msra.mxu0 0
        %611 = vmatpush.bf16.msra.mxu0 0
        %612 = vmatpush.bf16.msra.mxu0 %v591
        %613 = vmatpush.bf16.msra.mxu0 %v590
        %614 = vmatmul.bf16.gmra.mxu0 %v595
        %v615 = vpop.f32.mrf.mxu0
        %v616 = vadd.f32 0.0, %v615
        %v617 = vpop.f32.mrf.mxu0
        %v618 = vadd.f32 0.0, %v617
        %619 = vmatmul.bf16.gmra.mxu0 %v598
        %v620 = vpop.f32.mrf.mxu0
        %v621 = vadd.f32 0.0, %v620
        %v622 = vpop.f32.mrf.mxu0
        %v623 = vadd.f32 0.0, %v622
        %624 = vmatmul.bf16.gmra.mxu0 %v601
        %v625 = vpop.f32.mrf.mxu0
        %v626 = vadd.f32 0.0, %v625
        %v627 = vpop.f32.mrf.mxu0
        %v628 = vadd.f32 0.0, %v627
        %629 = vmatmul.bf16.gmra.mxu0 %v604
        %v630 = vpop.f32.mrf.mxu0
        %v631 = vadd.f32 0.0, %v630
        %v632 = vpop.f32.mrf.mxu0
        %v633 = vadd.f32 0.0, %v632
        %634 = vdwg.mxu0
        %v639 = vunpack.c.l.b16 %v504
        %v640 = vunpack.c.l.b16 %v505
        %v641 = vunpack.c.l.b16 %v506
        %v642 = vunpack.c.l.b16 %v507
        %v643 = vpack.c.b16 %v640, %v639
        %v644 = vpack.c.b16 %v642, %v641
        %v648 = vsel %vm422, %v500, 0
        %v651 = vsel %vm422, %v501, 0
        %v654 = vsel %vm422, %v502, 0
        %v657 = vsel %vm422, %v503, 0
        %659 = vmatpush.bf16.msra.mxu0 0
        %660 = vmatpush.bf16.msra.mxu0 0
        %661 = vmatpush.bf16.msra.mxu0 0
        %662 = vmatpush.bf16.msra.mxu0 0
        %663 = vmatpush.bf16.msra.mxu0 0
        %664 = vmatpush.bf16.msra.mxu0 0
        %665 = vmatpush.bf16.msra.mxu0 %v644
        %666 = vmatpush.bf16.msra.mxu0 %v643
        %667 = vmatmul.bf16.gmra.mxu0 %v648
        %v668 = vpop.f32.mrf.mxu0
        %v669 = vadd.f32 %v616, %v668
        %v670 = vpop.f32.mrf.mxu0
        %v671 = vadd.f32 %v618, %v670
        %672 = vmatmul.bf16.gmra.mxu0 %v651
        %v673 = vpop.f32.mrf.mxu0
        %v674 = vadd.f32 %v621, %v673
        %v675 = vpop.f32.mrf.mxu0
        %v676 = vadd.f32 %v623, %v675
        %677 = vmatmul.bf16.gmra.mxu0 %v654
        %v678 = vpop.f32.mrf.mxu0
        %v679 = vadd.f32 %v626, %v678
        %v680 = vpop.f32.mrf.mxu0
        %v681 = vadd.f32 %v628, %v680
        %682 = vmatmul.bf16.gmra.mxu0 %v657
        %v683 = vpop.f32.mrf.mxu0
        %v684 = vadd.f32 %v631, %v683
        %v685 = vpop.f32.mrf.mxu0
        %v686 = vadd.f32 %v633, %v685
        %687 = vdwg.mxu0
        %v688 = vld [vmem:[#allocation2 + $0x2] sm:$0xff]
        %v689 = vld [vmem:[#allocation2 + $0xa] sm:$0xff]
        %v690 = vld [vmem:[#allocation2 + $0x12] sm:$0xff]
        %v691 = vld [vmem:[#allocation2 + $0x1a] sm:$0xff]
        %v692 = vld [vmem:[#allocation2 + $0x22] sm:$0xff]
        %v693 = vld [vmem:[#allocation2 + $0x2a] sm:$0xff]
        %v694 = vld [vmem:[#allocation2 + $0x32] sm:$0xff]
        %v695 = vld [vmem:[#allocation2 + $0x3a] sm:$0xff]
        %s696 = scalar_lea.vmem %s7, 128
        %v697 = vld [vmem:[%s696] sm:$0xff]
        %v698 = vld [vmem:[%s696 + $0x8] sm:$0xff]
        %v699 = vld [vmem:[%s696 + $0x10] sm:$0xff]
        %v700 = vld [vmem:[%s696 + $0x18] sm:$0xff]
        %v701 = vld [vmem:[%s696 + $0x20] sm:$0xff]
        %v702 = vld [vmem:[%s696 + $0x28] sm:$0xff]
        %v703 = vld [vmem:[%s696 + $0x30] sm:$0xff]
        %v704 = vld [vmem:[%s696 + $0x38] sm:$0xff]
        %706 = vset.pattern.permute.xlu0 0
        %707 = vperm.xlu0 %706, %v697
        %v708 = vpop.permute.xlu0 %707
        %711 = vset.pattern.permute.xlu0 0
        %712 = vperm.xlu0 %711, %v698
        %v713 = vpop.permute.xlu0 %712
        %716 = vset.pattern.permute.xlu0 0
        %717 = vperm.xlu0 %716, %v699
        %v718 = vpop.permute.xlu0 %717
        %721 = vset.pattern.permute.xlu0 0
        %722 = vperm.xlu0 %721, %v700
        %v723 = vpop.permute.xlu0 %722
        %726 = vset.pattern.permute.xlu0 0
        %727 = vperm.xlu0 %726, %v701
        %v728 = vpop.permute.xlu0 %727
        %731 = vset.pattern.permute.xlu0 0
        %732 = vperm.xlu0 %731, %v702
        %v733 = vpop.permute.xlu0 %732
        %736 = vset.pattern.permute.xlu0 0
        %737 = vperm.xlu0 %736, %v703
        %v738 = vpop.permute.xlu0 %737
        %741 = vset.pattern.permute.xlu0 0
        %742 = vperm.xlu0 %741, %v704
        %v743 = vpop.permute.xlu0 %742
        %v745 = vmul.f32 %v688, %v708
        %v746 = vmul.f32 %v689, %v713
        %v747 = vmul.f32 %v690, %v718
        %v748 = vmul.f32 %v691, %v723
        %v749 = vmul.f32 %v692, %v728
        %v750 = vmul.f32 %v693, %v733
        %v751 = vmul.f32 %v694, %v738
        %v752 = vmul.f32 %v695, %v743
        %v753 = vpack.c.bf16 %v746, %v745
        %v754 = vpack.c.bf16 %v748, %v747
        %v755 = vpack.c.bf16 %v750, %v749
        %v756 = vpack.c.bf16 %v752, %v751
        %s757 = scalar_lea.vmem %s3, 32
        %v758 = vld [vmem:[%s757] sm:$0xf]
        %v759 = vld [vmem:[%s757 + $0x4] sm:$0xf]
        %v760 = vld [vmem:[%s757 + $0x8] sm:$0xf]
        %v761 = vld [vmem:[%s757 + $0xc] sm:$0xf]
        %v766 = vunpack.c.l.b16 %v758
        %v767 = vunpack.c.l.b16 %v759
        %v768 = vunpack.c.l.b16 %v760
        %v769 = vunpack.c.l.b16 %v761
        %v770 = vpack.c.b16 %v767, %v766
        %v771 = vpack.c.b16 %v769, %v768
        %v775 = vsel %vm422, %v753, 0
        %v778 = vsel %vm422, %v754, 0
        %v781 = vsel %vm422, %v755, 0
        %v784 = vsel %vm422, %v756, 0
        %786 = vmatpush.bf16.msra.mxu0 0
        %787 = vmatpush.bf16.msra.mxu0 0
        %788 = vmatpush.bf16.msra.mxu0 0
        %789 = vmatpush.bf16.msra.mxu0 0
        %790 = vmatpush.bf16.msra.mxu0 0
        %791 = vmatpush.bf16.msra.mxu0 0
        %792 = vmatpush.bf16.msra.mxu0 %v771
        %793 = vmatpush.bf16.msra.mxu0 %v770
        %794 = vmatmul.bf16.gmra.mxu0 %v775
        %v795 = vpop.f32.mrf.mxu0
        %v796 = vadd.f32 0.0, %v795
        %v797 = vpop.f32.mrf.mxu0
        %v798 = vadd.f32 0.0, %v797
        %799 = vmatmul.bf16.gmra.mxu0 %v778
        %v800 = vpop.f32.mrf.mxu0
        %v801 = vadd.f32 0.0, %v800
        %v802 = vpop.f32.mrf.mxu0
        %v803 = vadd.f32 0.0, %v802
        %804 = vmatmul.bf16.gmra.mxu0 %v781
        %v805 = vpop.f32.mrf.mxu0
        %v806 = vadd.f32 0.0, %v805
        %v807 = vpop.f32.mrf.mxu0
        %v808 = vadd.f32 0.0, %v807
        %809 = vmatmul.bf16.gmra.mxu0 %v784
        %v810 = vpop.f32.mrf.mxu0
        %v811 = vadd.f32 0.0, %v810
        %v812 = vpop.f32.mrf.mxu0
        %v813 = vadd.f32 0.0, %v812
        %814 = vdwg.mxu0
        %v815 = vadd.f32 %v669, %v796
        %v816 = vadd.f32 %v671, %v798
        %v817 = vadd.f32 %v674, %v801
        %v818 = vadd.f32 %v676, %v803
        %v819 = vadd.f32 %v679, %v806
        %v820 = vadd.f32 %v681, %v808
        %v821 = vadd.f32 %v684, %v811
        %v822 = vadd.f32 %v686, %v813
        %v823 = vld [vmem:[#allocation2 + $0x8] sm:$0xff]
        %v824 = vld [vmem:[#allocation2 + $0x10] sm:$0xff]
        %v825 = vld [vmem:[#allocation2 + $0x18] sm:$0xff]
        %v826 = vld [vmem:[#allocation2 + $0x20] sm:$0xff]
        %v827 = vld [vmem:[#allocation2 + $0x28] sm:$0xff]
        %v828 = vld [vmem:[#allocation2 + $0x30] sm:$0xff]
        %v829 = vld [vmem:[#allocation2 + $0x38] sm:$0xff]
        %v830 = vld [vmem:[#allocation2 + $0x40] sm:$0xff]
        %s831 = scalar_lea.vmem %s7, 192
        %v832 = vld [vmem:[%s831] sm:$0xff]
        %v833 = vld [vmem:[%s831 + $0x8] sm:$0xff]
        %v834 = vld [vmem:[%s831 + $0x10] sm:$0xff]
        %v835 = vld [vmem:[%s831 + $0x18] sm:$0xff]
        %v836 = vld [vmem:[%s831 + $0x20] sm:$0xff]
        %v837 = vld [vmem:[%s831 + $0x28] sm:$0xff]
        %v838 = vld [vmem:[%s831 + $0x30] sm:$0xff]
        %v839 = vld [vmem:[%s831 + $0x38] sm:$0xff]
        %841 = vset.pattern.permute.xlu0 0
        %842 = vperm.xlu0 %841, %v832
        %v843 = vpop.permute.xlu0 %842
        %846 = vset.pattern.permute.xlu0 0
        %847 = vperm.xlu0 %846, %v833
        %v848 = vpop.permute.xlu0 %847
        %851 = vset.pattern.permute.xlu0 0
        %852 = vperm.xlu0 %851, %v834
        %v853 = vpop.permute.xlu0 %852
        %856 = vset.pattern.permute.xlu0 0
        %857 = vperm.xlu0 %856, %v835
        %v858 = vpop.permute.xlu0 %857
        %861 = vset.pattern.permute.xlu0 0
        %862 = vperm.xlu0 %861, %v836
        %v863 = vpop.permute.xlu0 %862
        %866 = vset.pattern.permute.xlu0 0
        %867 = vperm.xlu0 %866, %v837
        %v868 = vpop.permute.xlu0 %867
        %871 = vset.pattern.permute.xlu0 0
        %872 = vperm.xlu0 %871, %v838
        %v873 = vpop.permute.xlu0 %872
        %876 = vset.pattern.permute.xlu0 0
        %877 = vperm.xlu0 %876, %v839
        %v878 = vpop.permute.xlu0 %877
        %v880 = vmul.f32 %v823, %v843
        %v881 = vmul.f32 %v824, %v848
        %v882 = vmul.f32 %v825, %v853
        %v883 = vmul.f32 %v826, %v858
        %v884 = vmul.f32 %v827, %v863
        %v885 = vmul.f32 %v828, %v868
        %v886 = vmul.f32 %v829, %v873
        %v887 = vmul.f32 %v830, %v878
        %v888 = vpack.c.bf16 %v881, %v880
        %v889 = vpack.c.bf16 %v883, %v882
        %v890 = vpack.c.bf16 %v885, %v884
        %v891 = vpack.c.bf16 %v887, %v886
        %s892 = scalar_lea.vmem %s3, 48
        %v893 = vld [vmem:[%s892] sm:$0xf]
        %v894 = vld [vmem:[%s892 + $0x4] sm:$0xf]
        %v895 = vld [vmem:[%s892 + $0x8] sm:$0xf]
        %v896 = vld [vmem:[%s892 + $0xc] sm:$0xf]
        %v901 = vunpack.c.l.b16 %v893
        %v902 = vunpack.c.l.b16 %v894
        %v903 = vunpack.c.l.b16 %v895
        %v904 = vunpack.c.l.b16 %v896
        %v905 = vpack.c.b16 %v902, %v901
        %v906 = vpack.c.b16 %v904, %v903
        %v910 = vsel %vm422, %v888, 0
        %v913 = vsel %vm422, %v889, 0
        %v916 = vsel %vm422, %v890, 0
        %v919 = vsel %vm422, %v891, 0
        %921 = vmatpush.bf16.msra.mxu0 0
        %922 = vmatpush.bf16.msra.mxu0 0
        %923 = vmatpush.bf16.msra.mxu0 0
        %924 = vmatpush.bf16.msra.mxu0 0
        %925 = vmatpush.bf16.msra.mxu0 0
        %926 = vmatpush.bf16.msra.mxu0 0
        %927 = vmatpush.bf16.msra.mxu0 %v906
        %928 = vmatpush.bf16.msra.mxu0 %v905
        %929 = vmatmul.bf16.gmra.mxu0 %v910
        %v930 = vpop.f32.mrf.mxu0
        %v931 = vadd.f32 0.0, %v930
        %v932 = vpop.f32.mrf.mxu0
        %v933 = vadd.f32 0.0, %v932
        %934 = vmatmul.bf16.gmra.mxu0 %v913
        %v935 = vpop.f32.mrf.mxu0
        %v936 = vadd.f32 0.0, %v935
        %v937 = vpop.f32.mrf.mxu0
        %v938 = vadd.f32 0.0, %v937
        %939 = vmatmul.bf16.gmra.mxu0 %v916
        %v940 = vpop.f32.mrf.mxu0
        %v941 = vadd.f32 0.0, %v940
        %v942 = vpop.f32.mrf.mxu0
        %v943 = vadd.f32 0.0, %v942
        %944 = vmatmul.bf16.gmra.mxu0 %v919
        %v945 = vpop.f32.mrf.mxu0
        %v946 = vadd.f32 0.0, %v945
        %v947 = vpop.f32.mrf.mxu0
        %v948 = vadd.f32 0.0, %v947
        %949 = vdwg.mxu0
        %v950 = vadd.f32 %v815, %v931
        %v951 = vadd.f32 %v816, %v933
        %v952 = vadd.f32 %v817, %v936
        %v953 = vadd.f32 %v818, %v938
        %v954 = vadd.f32 %v819, %v941
        %v955 = vadd.f32 %v820, %v943
        %v956 = vadd.f32 %v821, %v946
        %v957 = vadd.f32 %v822, %v948
        %v958 = vld [vmem:[#allocation2 + $0x9] sm:$0xff]
        %v959 = vld [vmem:[#allocation2 + $0x11] sm:$0xff]
        %v960 = vld [vmem:[#allocation2 + $0x19] sm:$0xff]
        %v961 = vld [vmem:[#allocation2 + $0x21] sm:$0xff]
        %v962 = vld [vmem:[#allocation2 + $0x29] sm:$0xff]
        %v963 = vld [vmem:[#allocation2 + $0x31] sm:$0xff]
        %v964 = vld [vmem:[#allocation2 + $0x39] sm:$0xff]
        %v965 = vld [vmem:[#allocation2 + $0x41] sm:$0xff]
        %s966 = scalar_lea.vmem %s7, 256
        %v967 = vld [vmem:[%s966] sm:$0xff]
        %v968 = vld [vmem:[%s966 + $0x8] sm:$0xff]
        %v969 = vld [vmem:[%s966 + $0x10] sm:$0xff]
        %v970 = vld [vmem:[%s966 + $0x18] sm:$0xff]
        %v971 = vld [vmem:[%s966 + $0x20] sm:$0xff]
        %v972 = vld [vmem:[%s966 + $0x28] sm:$0xff]
        %v973 = vld [vmem:[%s966 + $0x30] sm:$0xff]
        %v974 = vld [vmem:[%s966 + $0x38] sm:$0xff]
        %976 = vset.pattern.permute.xlu0 0
        %977 = vperm.xlu0 %976, %v967
        %v978 = vpop.permute.xlu0 %977
        %981 = vset.pattern.permute.xlu0 0
        %982 = vperm.xlu0 %981, %v968
        %v983 = vpop.permute.xlu0 %982
        %986 = vset.pattern.permute.xlu0 0
        %987 = vperm.xlu0 %986, %v969
        %v988 = vpop.permute.xlu0 %987
        %991 = vset.pattern.permute.xlu0 0
        %992 = vperm.xlu0 %991, %v970
        %v993 = vpop.permute.xlu0 %992
        %996 = vset.pattern.permute.xlu0 0
        %997 = vperm.xlu0 %996, %v971
        %v998 = vpop.permute.xlu0 %997
        %1001 = vset.pattern.permute.xlu0 0
        %1002 = vperm.xlu0 %1001, %v972
        %v1003 = vpop.permute.xlu0 %1002
        %1006 = vset.pattern.permute.xlu0 0
        %1007 = vperm.xlu0 %1006, %v973
        %v1008 = vpop.permute.xlu0 %1007
        %1011 = vset.pattern.permute.xlu0 0
        %1012 = vperm.xlu0 %1011, %v974
        %v1013 = vpop.permute.xlu0 %1012
        %v1015 = vmul.f32 %v958, %v978
        %v1016 = vmul.f32 %v959, %v983
        %v1017 = vmul.f32 %v960, %v988
        %v1018 = vmul.f32 %v961, %v993
        %v1019 = vmul.f32 %v962, %v998
        %v1020 = vmul.f32 %v963, %v1003
        %v1021 = vmul.f32 %v964, %v1008
        %v1022 = vmul.f32 %v965, %v1013
        %v1023 = vpack.c.bf16 %v1016, %v1015
        %v1024 = vpack.c.bf16 %v1018, %v1017
        %v1025 = vpack.c.bf16 %v1020, %v1019
        %v1026 = vpack.c.bf16 %v1022, %v1021
        %s1027 = scalar_lea.vmem %s3, 64
        %v1028 = vld [vmem:[%s1027] sm:$0xf]
        %v1029 = vld [vmem:[%s1027 + $0x4] sm:$0xf]
        %v1030 = vld [vmem:[%s1027 + $0x8] sm:$0xf]
        %v1031 = vld [vmem:[%s1027 + $0xc] sm:$0xf]
        %v1036 = vunpack.c.l.b16 %v1028
        %v1037 = vunpack.c.l.b16 %v1029
        %v1038 = vunpack.c.l.b16 %v1030
        %v1039 = vunpack.c.l.b16 %v1031
        %v1040 = vpack.c.b16 %v1037, %v1036
        %v1041 = vpack.c.b16 %v1039, %v1038
        %v1045 = vsel %vm422, %v1023, 0
        %v1048 = vsel %vm422, %v1024, 0
        %v1051 = vsel %vm422, %v1025, 0
        %v1054 = vsel %vm422, %v1026, 0
        %1056 = vmatpush.bf16.msra.mxu0 0
        %1057 = vmatpush.bf16.msra.mxu0 0
        %1058 = vmatpush.bf16.msra.mxu0 0
        %1059 = vmatpush.bf16.msra.mxu0 0
        %1060 = vmatpush.bf16.msra.mxu0 0
        %1061 = vmatpush.bf16.msra.mxu0 0
        %1062 = vmatpush.bf16.msra.mxu0 %v1041
        %1063 = vmatpush.bf16.msra.mxu0 %v1040
        %1064 = vmatmul.bf16.gmra.mxu0 %v1045
        %v1065 = vpop.f32.mrf.mxu0
        %v1066 = vadd.f32 0.0, %v1065
        %v1067 = vpop.f32.mrf.mxu0
        %v1068 = vadd.f32 0.0, %v1067
        %1069 = vmatmul.bf16.gmra.mxu0 %v1048
        %v1070 = vpop.f32.mrf.mxu0
        %v1071 = vadd.f32 0.0, %v1070
        %v1072 = vpop.f32.mrf.mxu0
        %v1073 = vadd.f32 0.0, %v1072
        %1074 = vmatmul.bf16.gmra.mxu0 %v1051
        %v1075 = vpop.f32.mrf.mxu0
        %v1076 = vadd.f32 0.0, %v1075
        %v1077 = vpop.f32.mrf.mxu0
        %v1078 = vadd.f32 0.0, %v1077
        %1079 = vmatmul.bf16.gmra.mxu0 %v1054
        %v1080 = vpop.f32.mrf.mxu0
        %v1081 = vadd.f32 0.0, %v1080
        %v1082 = vpop.f32.mrf.mxu0
        %v1083 = vadd.f32 0.0, %v1082
        %1084 = vdwg.mxu0
        %v1085 = vadd.f32 %v950, %v1066
        %v1086 = vadd.f32 %v951, %v1068
        %v1087 = vadd.f32 %v952, %v1071
        %v1088 = vadd.f32 %v953, %v1073
        %v1089 = vadd.f32 %v954, %v1076
        %v1090 = vadd.f32 %v955, %v1078
        %v1091 = vadd.f32 %v956, %v1081
        %v1092 = vadd.f32 %v957, %v1083
        %v1093 = vld [vmem:[#allocation2 + $0xa] sm:$0xff]
        %v1094 = vld [vmem:[#allocation2 + $0x12] sm:$0xff]
        %v1095 = vld [vmem:[#allocation2 + $0x1a] sm:$0xff]
        %v1096 = vld [vmem:[#allocation2 + $0x22] sm:$0xff]
        %v1097 = vld [vmem:[#allocation2 + $0x2a] sm:$0xff]
        %v1098 = vld [vmem:[#allocation2 + $0x32] sm:$0xff]
        %v1099 = vld [vmem:[#allocation2 + $0x3a] sm:$0xff]
        %v1100 = vld [vmem:[#allocation2 + $0x42] sm:$0xff]
        %s1101 = scalar_lea.vmem %s7, 320
        %v1102 = vld [vmem:[%s1101] sm:$0xff]
        %v1103 = vld [vmem:[%s1101 + $0x8] sm:$0xff]
        %v1104 = vld [vmem:[%s1101 + $0x10] sm:$0xff]
        %v1105 = vld [vmem:[%s1101 + $0x18] sm:$0xff]
        %v1106 = vld [vmem:[%s1101 + $0x20] sm:$0xff]
        %v1107 = vld [vmem:[%s1101 + $0x28] sm:$0xff]
        %v1108 = vld [vmem:[%s1101 + $0x30] sm:$0xff]
        %v1109 = vld [vmem:[%s1101 + $0x38] sm:$0xff]
        %1111 = vset.pattern.permute.xlu0 0
        %1112 = vperm.xlu0 %1111, %v1102
        %v1113 = vpop.permute.xlu0 %1112
        %1116 = vset.pattern.permute.xlu0 0
        %1117 = vperm.xlu0 %1116, %v1103
        %v1118 = vpop.permute.xlu0 %1117
        %1121 = vset.pattern.permute.xlu0 0
        %1122 = vperm.xlu0 %1121, %v1104
        %v1123 = vpop.permute.xlu0 %1122
        %1126 = vset.pattern.permute.xlu0 0
        %1127 = vperm.xlu0 %1126, %v1105
        %v1128 = vpop.permute.xlu0 %1127
        %1131 = vset.pattern.permute.xlu0 0
        %1132 = vperm.xlu0 %1131, %v1106
        %v1133 = vpop.permute.xlu0 %1132
        %1136 = vset.pattern.permute.xlu0 0
        %1137 = vperm.xlu0 %1136, %v1107
        %v1138 = vpop.permute.xlu0 %1137
        %1141 = vset.pattern.permute.xlu0 0
        %1142 = vperm.xlu0 %1141, %v1108
        %v1143 = vpop.permute.xlu0 %1142
        %1146 = vset.pattern.permute.xlu0 0
        %1147 = vperm.xlu0 %1146, %v1109
        %v1148 = vpop.permute.xlu0 %1147
        %v1150 = vmul.f32 %v1093, %v1113
        %v1151 = vmul.f32 %v1094, %v1118
        %v1152 = vmul.f32 %v1095, %v1123
        %v1153 = vmul.f32 %v1096, %v1128
        %v1154 = vmul.f32 %v1097, %v1133
        %v1155 = vmul.f32 %v1098, %v1138
        %v1156 = vmul.f32 %v1099, %v1143
        %v1157 = vmul.f32 %v1100, %v1148
        %v1158 = vpack.c.bf16 %v1151, %v1150
        %v1159 = vpack.c.bf16 %v1153, %v1152
        %v1160 = vpack.c.bf16 %v1155, %v1154
        %v1161 = vpack.c.bf16 %v1157, %v1156
        %s1162 = scalar_lea.vmem %s3, 80
        %v1163 = vld [vmem:[%s1162] sm:$0xf]
        %v1164 = vld [vmem:[%s1162 + $0x4] sm:$0xf]
        %v1165 = vld [vmem:[%s1162 + $0x8] sm:$0xf]
        %v1166 = vld [vmem:[%s1162 + $0xc] sm:$0xf]
        %v1171 = vunpack.c.l.b16 %v1163
        %v1172 = vunpack.c.l.b16 %v1164
        %v1173 = vunpack.c.l.b16 %v1165
        %v1174 = vunpack.c.l.b16 %v1166
        %v1175 = vpack.c.b16 %v1172, %v1171
        %v1176 = vpack.c.b16 %v1174, %v1173
        %v1180 = vsel %vm422, %v1158, 0
        %v1183 = vsel %vm422, %v1159, 0
        %v1186 = vsel %vm422, %v1160, 0
        %v1189 = vsel %vm422, %v1161, 0
        %1191 = vmatpush.bf16.msra.mxu0 0
        %1192 = vmatpush.bf16.msra.mxu0 0
        %1193 = vmatpush.bf16.msra.mxu0 0
        %1194 = vmatpush.bf16.msra.mxu0 0
        %1195 = vmatpush.bf16.msra.mxu0 0
        %1196 = vmatpush.bf16.msra.mxu0 0
        %1197 = vmatpush.bf16.msra.mxu0 %v1176
        %1198 = vmatpush.bf16.msra.mxu0 %v1175
        %1199 = vmatmul.bf16.gmra.mxu0 %v1180
        %v1200 = vpop.f32.mrf.mxu0
        %v1201 = vadd.f32 0.0, %v1200
        %v1202 = vpop.f32.mrf.mxu0
        %v1203 = vadd.f32 0.0, %v1202
        %1204 = vmatmul.bf16.gmra.mxu0 %v1183
        %v1205 = vpop.f32.mrf.mxu0
        %v1206 = vadd.f32 0.0, %v1205
        %v1207 = vpop.f32.mrf.mxu0
        %v1208 = vadd.f32 0.0, %v1207
        %1209 = vmatmul.bf16.gmra.mxu0 %v1186
        %v1210 = vpop.f32.mrf.mxu0
        %v1211 = vadd.f32 0.0, %v1210
        %v1212 = vpop.f32.mrf.mxu0
        %v1213 = vadd.f32 0.0, %v1212
        %1214 = vmatmul.bf16.gmra.mxu0 %v1189
        %v1215 = vpop.f32.mrf.mxu0
        %v1216 = vadd.f32 0.0, %v1215
        %v1217 = vpop.f32.mrf.mxu0
        %v1218 = vadd.f32 0.0, %v1217
        %1219 = vdwg.mxu0
        %v1220 = vadd.f32 %v1085, %v1201
        %v1221 = vadd.f32 %v1086, %v1203
        %v1222 = vadd.f32 %v1087, %v1206
        %v1223 = vadd.f32 %v1088, %v1208
        %v1224 = vadd.f32 %v1089, %v1211
        %v1225 = vadd.f32 %v1090, %v1213
        %v1226 = vadd.f32 %v1091, %v1216
        %v1227 = vadd.f32 %v1092, %v1218
        %v1228 = vld [vmem:[#allocation2 + $0x10] sm:$0xff]
        %v1229 = vld [vmem:[#allocation2 + $0x18] sm:$0xff]
        %v1230 = vld [vmem:[#allocation2 + $0x20] sm:$0xff]
        %v1231 = vld [vmem:[#allocation2 + $0x28] sm:$0xff]
        %v1232 = vld [vmem:[#allocation2 + $0x30] sm:$0xff]
        %v1233 = vld [vmem:[#allocation2 + $0x38] sm:$0xff]
        %v1234 = vld [vmem:[#allocation2 + $0x40] sm:$0xff]
        %v1235 = vld [vmem:[#allocation2 + $0x48] sm:$0xff]
        %s1236 = scalar_lea.vmem %s7, 384
        %v1237 = vld [vmem:[%s1236] sm:$0xff]
        %v1238 = vld [vmem:[%s1236 + $0x8] sm:$0xff]
        %v1239 = vld [vmem:[%s1236 + $0x10] sm:$0xff]
        %v1240 = vld [vmem:[%s1236 + $0x18] sm:$0xff]
        %v1241 = vld [vmem:[%s1236 + $0x20] sm:$0xff]
        %v1242 = vld [vmem:[%s1236 + $0x28] sm:$0xff]
        %v1243 = vld [vmem:[%s1236 + $0x30] sm:$0xff]
        %v1244 = vld [vmem:[%s1236 + $0x38] sm:$0xff]
        %1246 = vset.pattern.permute.xlu0 0
        %1247 = vperm.xlu0 %1246, %v1237
        %v1248 = vpop.permute.xlu0 %1247
        %1251 = vset.pattern.permute.xlu0 0
        %1252 = vperm.xlu0 %1251, %v1238
        %v1253 = vpop.permute.xlu0 %1252
        %1256 = vset.pattern.permute.xlu0 0
        %1257 = vperm.xlu0 %1256, %v1239
        %v1258 = vpop.permute.xlu0 %1257
        %1261 = vset.pattern.permute.xlu0 0
        %1262 = vperm.xlu0 %1261, %v1240
        %v1263 = vpop.permute.xlu0 %1262
        %1266 = vset.pattern.permute.xlu0 0
        %1267 = vperm.xlu0 %1266, %v1241
        %v1268 = vpop.permute.xlu0 %1267
        %1271 = vset.pattern.permute.xlu0 0
        %1272 = vperm.xlu0 %1271, %v1242
        %v1273 = vpop.permute.xlu0 %1272
        %1276 = vset.pattern.permute.xlu0 0
        %1277 = vperm.xlu0 %1276, %v1243
        %v1278 = vpop.permute.xlu0 %1277
        %1281 = vset.pattern.permute.xlu0 0
        %1282 = vperm.xlu0 %1281, %v1244
        %v1283 = vpop.permute.xlu0 %1282
        %v1285 = vmul.f32 %v1228, %v1248
        %v1286 = vmul.f32 %v1229, %v1253
        %v1287 = vmul.f32 %v1230, %v1258
        %v1288 = vmul.f32 %v1231, %v1263
        %v1289 = vmul.f32 %v1232, %v1268
        %v1290 = vmul.f32 %v1233, %v1273
        %v1291 = vmul.f32 %v1234, %v1278
        %v1292 = vmul.f32 %v1235, %v1283
        %v1293 = vpack.c.bf16 %v1286, %v1285
        %v1294 = vpack.c.bf16 %v1288, %v1287
        %v1295 = vpack.c.bf16 %v1290, %v1289
        %v1296 = vpack.c.bf16 %v1292, %v1291
        %s1297 = scalar_lea.vmem %s3, 96
        %v1298 = vld [vmem:[%s1297] sm:$0xf]
        %v1299 = vld [vmem:[%s1297 + $0x4] sm:$0xf]
        %v1300 = vld [vmem:[%s1297 + $0x8] sm:$0xf]
        %v1301 = vld [vmem:[%s1297 + $0xc] sm:$0xf]
        %v1306 = vunpack.c.l.b16 %v1298
        %v1307 = vunpack.c.l.b16 %v1299
        %v1308 = vunpack.c.l.b16 %v1300
        %v1309 = vunpack.c.l.b16 %v1301
        %v1310 = vpack.c.b16 %v1307, %v1306
        %v1311 = vpack.c.b16 %v1309, %v1308
        %v1315 = vsel %vm422, %v1293, 0
        %v1318 = vsel %vm422, %v1294, 0
        %v1321 = vsel %vm422, %v1295, 0
        %v1324 = vsel %vm422, %v1296, 0
        %1326 = vmatpush.bf16.msra.mxu0 0
        %1327 = vmatpush.bf16.msra.mxu0 0
        %1328 = vmatpush.bf16.msra.mxu0 0
        %1329 = vmatpush.bf16.msra.mxu0 0
        %1330 = vmatpush.bf16.msra.mxu0 0
        %1331 = vmatpush.bf16.msra.mxu0 0
        %1332 = vmatpush.bf16.msra.mxu0 %v1311
        %1333 = vmatpush.bf16.msra.mxu0 %v1310
        %1334 = vmatmul.bf16.gmra.mxu0 %v1315
        %v1335 = vpop.f32.mrf.mxu0
        %v1336 = vadd.f32 0.0, %v1335
        %v1337 = vpop.f32.mrf.mxu0
        %v1338 = vadd.f32 0.0, %v1337
        %1339 = vmatmul.bf16.gmra.mxu0 %v1318
        %v1340 = vpop.f32.mrf.mxu0
        %v1341 = vadd.f32 0.0, %v1340
        %v1342 = vpop.f32.mrf.mxu0
        %v1343 = vadd.f32 0.0, %v1342
        %1344 = vmatmul.bf16.gmra.mxu0 %v1321
        %v1345 = vpop.f32.mrf.mxu0
        %v1346 = vadd.f32 0.0, %v1345
        %v1347 = vpop.f32.mrf.mxu0
        %v1348 = vadd.f32 0.0, %v1347
        %1349 = vmatmul.bf16.gmra.mxu0 %v1324
        %v1350 = vpop.f32.mrf.mxu0
        %v1351 = vadd.f32 0.0, %v1350
        %v1352 = vpop.f32.mrf.mxu0
        %v1353 = vadd.f32 0.0, %v1352
        %1354 = vdwg.mxu0
        %v1355 = vadd.f32 %v1220, %v1336
        %v1356 = vadd.f32 %v1221, %v1338
        %v1357 = vadd.f32 %v1222, %v1341
        %v1358 = vadd.f32 %v1223, %v1343
        %v1359 = vadd.f32 %v1224, %v1346
        %v1360 = vadd.f32 %v1225, %v1348
        %v1361 = vadd.f32 %v1226, %v1351
        %v1362 = vadd.f32 %v1227, %v1353
        %v1363 = vld [vmem:[#allocation2 + $0x11] sm:$0xff]
        %v1364 = vld [vmem:[#allocation2 + $0x19] sm:$0xff]
        %v1365 = vld [vmem:[#allocation2 + $0x21] sm:$0xff]
        %v1366 = vld [vmem:[#allocation2 + $0x29] sm:$0xff]
        %v1367 = vld [vmem:[#allocation2 + $0x31] sm:$0xff]
        %v1368 = vld [vmem:[#allocation2 + $0x39] sm:$0xff]
        %v1369 = vld [vmem:[#allocation2 + $0x41] sm:$0xff]
        %v1370 = vld [vmem:[#allocation2 + $0x49] sm:$0xff]
        %s1371 = scalar_lea.vmem %s7, 448
        %v1372 = vld [vmem:[%s1371] sm:$0xff]
        %v1373 = vld [vmem:[%s1371 + $0x8] sm:$0xff]
        %v1374 = vld [vmem:[%s1371 + $0x10] sm:$0xff]
        %v1375 = vld [vmem:[%s1371 + $0x18] sm:$0xff]
        %v1376 = vld [vmem:[%s1371 + $0x20] sm:$0xff]
        %v1377 = vld [vmem:[%s1371 + $0x28] sm:$0xff]
        %v1378 = vld [vmem:[%s1371 + $0x30] sm:$0xff]
        %v1379 = vld [vmem:[%s1371 + $0x38] sm:$0xff]
        %1381 = vset.pattern.permute.xlu0 0
        %1382 = vperm.xlu0 %1381, %v1372
        %v1383 = vpop.permute.xlu0 %1382
        %1386 = vset.pattern.permute.xlu0 0
        %1387 = vperm.xlu0 %1386, %v1373
        %v1388 = vpop.permute.xlu0 %1387
        %1391 = vset.pattern.permute.xlu0 0
        %1392 = vperm.xlu0 %1391, %v1374
        %v1393 = vpop.permute.xlu0 %1392
        %1396 = vset.pattern.permute.xlu0 0
        %1397 = vperm.xlu0 %1396, %v1375
        %v1398 = vpop.permute.xlu0 %1397
        %1401 = vset.pattern.permute.xlu0 0
        %1402 = vperm.xlu0 %1401, %v1376
        %v1403 = vpop.permute.xlu0 %1402
        %1406 = vset.pattern.permute.xlu0 0
        %1407 = vperm.xlu0 %1406, %v1377
        %v1408 = vpop.permute.xlu0 %1407
        %1411 = vset.pattern.permute.xlu0 0
        %1412 = vperm.xlu0 %1411, %v1378
        %v1413 = vpop.permute.xlu0 %1412
        %1416 = vset.pattern.permute.xlu0 0
        %1417 = vperm.xlu0 %1416, %v1379
        %v1418 = vpop.permute.xlu0 %1417
        %v1420 = vmul.f32 %v1363, %v1383
        %v1421 = vmul.f32 %v1364, %v1388
        %v1422 = vmul.f32 %v1365, %v1393
        %v1423 = vmul.f32 %v1366, %v1398
        %v1424 = vmul.f32 %v1367, %v1403
        %v1425 = vmul.f32 %v1368, %v1408
        %v1426 = vmul.f32 %v1369, %v1413
        %v1427 = vmul.f32 %v1370, %v1418
        %v1428 = vpack.c.bf16 %v1421, %v1420
        %v1429 = vpack.c.bf16 %v1423, %v1422
        %v1430 = vpack.c.bf16 %v1425, %v1424
        %v1431 = vpack.c.bf16 %v1427, %v1426
        %s1432 = scalar_lea.vmem %s3, 112
        %v1433 = vld [vmem:[%s1432] sm:$0xf]
        %v1434 = vld [vmem:[%s1432 + $0x4] sm:$0xf]
        %v1435 = vld [vmem:[%s1432 + $0x8] sm:$0xf]
        %v1436 = vld [vmem:[%s1432 + $0xc] sm:$0xf]
        %v1441 = vunpack.c.l.b16 %v1433
        %v1442 = vunpack.c.l.b16 %v1434
        %v1443 = vunpack.c.l.b16 %v1435
        %v1444 = vunpack.c.l.b16 %v1436
        %v1445 = vpack.c.b16 %v1442, %v1441
        %v1446 = vpack.c.b16 %v1444, %v1443
        %v1450 = vsel %vm422, %v1428, 0
        %v1453 = vsel %vm422, %v1429, 0
        %v1456 = vsel %vm422, %v1430, 0
        %v1459 = vsel %vm422, %v1431, 0
        %1461 = vmatpush.bf16.msra.mxu0 0
        %1462 = vmatpush.bf16.msra.mxu0 0
        %1463 = vmatpush.bf16.msra.mxu0 0
        %1464 = vmatpush.bf16.msra.mxu0 0
        %1465 = vmatpush.bf16.msra.mxu0 0
        %1466 = vmatpush.bf16.msra.mxu0 0
        %1467 = vmatpush.bf16.msra.mxu0 %v1446
        %1468 = vmatpush.bf16.msra.mxu0 %v1445
        %1469 = vmatmul.bf16.gmra.mxu0 %v1450
        %v1470 = vpop.f32.mrf.mxu0
        %v1471 = vadd.f32 0.0, %v1470
        %v1472 = vpop.f32.mrf.mxu0
        %v1473 = vadd.f32 0.0, %v1472
        %1474 = vmatmul.bf16.gmra.mxu0 %v1453
        %v1475 = vpop.f32.mrf.mxu0
        %v1476 = vadd.f32 0.0, %v1475
        %v1477 = vpop.f32.mrf.mxu0
        %v1478 = vadd.f32 0.0, %v1477
        %1479 = vmatmul.bf16.gmra.mxu0 %v1456
        %v1480 = vpop.f32.mrf.mxu0
        %v1481 = vadd.f32 0.0, %v1480
        %v1482 = vpop.f32.mrf.mxu0
        %v1483 = vadd.f32 0.0, %v1482
        %1484 = vmatmul.bf16.gmra.mxu0 %v1459
        %v1485 = vpop.f32.mrf.mxu0
        %v1486 = vadd.f32 0.0, %v1485
        %v1487 = vpop.f32.mrf.mxu0
        %v1488 = vadd.f32 0.0, %v1487
        %1489 = vdwg.mxu0
        %v1490 = vadd.f32 %v1355, %v1471
        %v1491 = vadd.f32 %v1356, %v1473
        %v1492 = vadd.f32 %v1357, %v1476
        %v1493 = vadd.f32 %v1358, %v1478
        %v1494 = vadd.f32 %v1359, %v1481
        %v1495 = vadd.f32 %v1360, %v1483
        %v1496 = vadd.f32 %v1361, %v1486
        %v1497 = vadd.f32 %v1362, %v1488
        %v1498 = vld [vmem:[#allocation2 + $0x12] sm:$0xff]
        %v1499 = vld [vmem:[#allocation2 + $0x1a] sm:$0xff]
        %v1500 = vld [vmem:[#allocation2 + $0x22] sm:$0xff]
        %v1501 = vld [vmem:[#allocation2 + $0x2a] sm:$0xff]
        %v1502 = vld [vmem:[#allocation2 + $0x32] sm:$0xff]
        %v1503 = vld [vmem:[#allocation2 + $0x3a] sm:$0xff]
        %v1504 = vld [vmem:[#allocation2 + $0x42] sm:$0xff]
        %v1505 = vld [vmem:[#allocation2 + $0x4a] sm:$0xff]
        %s1506 = scalar_lea.vmem %s7, 512
        %v1507 = vld [vmem:[%s1506] sm:$0xff]
        %v1508 = vld [vmem:[%s1506 + $0x8] sm:$0xff]
        %v1509 = vld [vmem:[%s1506 + $0x10] sm:$0xff]
        %v1510 = vld [vmem:[%s1506 + $0x18] sm:$0xff]
        %v1511 = vld [vmem:[%s1506 + $0x20] sm:$0xff]
        %v1512 = vld [vmem:[%s1506 + $0x28] sm:$0xff]
        %v1513 = vld [vmem:[%s1506 + $0x30] sm:$0xff]
        %v1514 = vld [vmem:[%s1506 + $0x38] sm:$0xff]
        %1516 = vset.pattern.permute.xlu0 0
        %1517 = vperm.xlu0 %1516, %v1507
        %v1518 = vpop.permute.xlu0 %1517
        %1521 = vset.pattern.permute.xlu0 0
        %1522 = vperm.xlu0 %1521, %v1508
        %v1523 = vpop.permute.xlu0 %1522
        %1526 = vset.pattern.permute.xlu0 0
        %1527 = vperm.xlu0 %1526, %v1509
        %v1528 = vpop.permute.xlu0 %1527
        %1531 = vset.pattern.permute.xlu0 0
        %1532 = vperm.xlu0 %1531, %v1510
        %v1533 = vpop.permute.xlu0 %1532
        %1536 = vset.pattern.permute.xlu0 0
        %1537 = vperm.xlu0 %1536, %v1511
        %v1538 = vpop.permute.xlu0 %1537
        %1541 = vset.pattern.permute.xlu0 0
        %1542 = vperm.xlu0 %1541, %v1512
        %v1543 = vpop.permute.xlu0 %1542
        %1546 = vset.pattern.permute.xlu0 0
        %1547 = vperm.xlu0 %1546, %v1513
        %v1548 = vpop.permute.xlu0 %1547
        %1551 = vset.pattern.permute.xlu0 0
        %1552 = vperm.xlu0 %1551, %v1514
        %v1553 = vpop.permute.xlu0 %1552
        %v1555 = vmul.f32 %v1498, %v1518
        %v1556 = vmul.f32 %v1499, %v1523
        %v1557 = vmul.f32 %v1500, %v1528
        %v1558 = vmul.f32 %v1501, %v1533
        %v1559 = vmul.f32 %v1502, %v1538
        %v1560 = vmul.f32 %v1503, %v1543
        %v1561 = vmul.f32 %v1504, %v1548
        %v1562 = vmul.f32 %v1505, %v1553
        %v1563 = vpack.c.bf16 %v1556, %v1555
        %v1564 = vpack.c.bf16 %v1558, %v1557
        %v1565 = vpack.c.bf16 %v1560, %v1559
        %v1566 = vpack.c.bf16 %v1562, %v1561
        %s1567 = scalar_lea.vmem %s3, 128
        %v1568 = vld [vmem:[%s1567] sm:$0xf]
        %v1569 = vld [vmem:[%s1567 + $0x4] sm:$0xf]
        %v1570 = vld [vmem:[%s1567 + $0x8] sm:$0xf]
        %v1571 = vld [vmem:[%s1567 + $0xc] sm:$0xf]
        %v1576 = vunpack.c.l.b16 %v1568
        %v1577 = vunpack.c.l.b16 %v1569
        %v1578 = vunpack.c.l.b16 %v1570
        %v1579 = vunpack.c.l.b16 %v1571
        %v1580 = vpack.c.b16 %v1577, %v1576
        %v1581 = vpack.c.b16 %v1579, %v1578
        %v1585 = vsel %vm422, %v1563, 0
        %v1588 = vsel %vm422, %v1564, 0
        %v1591 = vsel %vm422, %v1565, 0
        %v1594 = vsel %vm422, %v1566, 0
        %1596 = vmatpush.bf16.msra.mxu0 0
        %1597 = vmatpush.bf16.msra.mxu0 0
        %1598 = vmatpush.bf16.msra.mxu0 0
        %1599 = vmatpush.bf16.msra.mxu0 0
        %1600 = vmatpush.bf16.msra.mxu0 0
        %1601 = vmatpush.bf16.msra.mxu0 0
        %1602 = vmatpush.bf16.msra.mxu0 %v1581
        %1603 = vmatpush.bf16.msra.mxu0 %v1580
        %1604 = vmatmul.bf16.gmra.mxu0 %v1585
        %v1605 = vpop.f32.mrf.mxu0
        %v1606 = vadd.f32 0.0, %v1605
        %v1607 = vpop.f32.mrf.mxu0
        %v1608 = vadd.f32 0.0, %v1607
        %1609 = vmatmul.bf16.gmra.mxu0 %v1588
        %v1610 = vpop.f32.mrf.mxu0
        %v1611 = vadd.f32 0.0, %v1610
        %v1612 = vpop.f32.mrf.mxu0
        %v1613 = vadd.f32 0.0, %v1612
        %1614 = vmatmul.bf16.gmra.mxu0 %v1591
        %v1615 = vpop.f32.mrf.mxu0
        %v1616 = vadd.f32 0.0, %v1615
        %v1617 = vpop.f32.mrf.mxu0
        %v1618 = vadd.f32 0.0, %v1617
        %1619 = vmatmul.bf16.gmra.mxu0 %v1594
        %v1620 = vpop.f32.mrf.mxu0
        %v1621 = vadd.f32 0.0, %v1620
        %v1622 = vpop.f32.mrf.mxu0
        %v1623 = vadd.f32 0.0, %v1622
        %1624 = vdwg.mxu0
        %v1625 = vadd.f32 %v1490, %v1606
        %v1626 = vadd.f32 %v1491, %v1608
        %v1627 = vadd.f32 %v1492, %v1611
        %v1628 = vadd.f32 %v1493, %v1613
        %v1629 = vadd.f32 %v1494, %v1616
        %v1630 = vadd.f32 %v1495, %v1618
        %v1631 = vadd.f32 %v1496, %v1621
        %v1632 = vadd.f32 %v1497, %v1623
        %v1633 = vld [vmem:[%s4] sm:$0x1]
        %v1635 = vperm.slane %v1633, 0
        %v1637 = vadd.f32 %v1625, %v1635
        %v1638 = vadd.f32 %v1626, %v1635
        %v1639 = vadd.f32 %v1627, %v1635
        %v1640 = vadd.f32 %v1628, %v1635
        %v1641 = vadd.f32 %v1629, %v1635
        %v1642 = vadd.f32 %v1630, %v1635
        %v1643 = vadd.f32 %v1631, %v1635
        %v1644 = vadd.f32 %v1632, %v1635
        %v1645 = vmax.f32 %v1637, 0.0
        %v1646 = vmax.f32 %v1638, 0.0
        %v1647 = vmax.f32 %v1639, 0.0
        %v1648 = vmax.f32 %v1640, 0.0
        %v1649 = vmax.f32 %v1641, 0.0
        %v1650 = vmax.f32 %v1642, 0.0
        %v1651 = vmax.f32 %v1643, 0.0
        %v1652 = vmax.f32 %v1644, 0.0
        %v1653 = vpack.c.bf16 %v1646, %v1645
        %v1654 = vpack.c.bf16 %v1648, %v1647
        %v1655 = vpack.c.bf16 %v1650, %v1649
        %v1656 = vpack.c.bf16 %v1652, %v1651
        %v1657 = vld [vmem:[%s5] sm:$0xf]
        %v1658 = vld [vmem:[%s5 + $0x4] sm:$0xf]
        %v1659 = vld [vmem:[%s5 + $0x8] sm:$0xf]
        %v1660 = vld [vmem:[%s5 + $0xc] sm:$0xf]
        %v1661 = vld [vmem:[%s6] sm:$0x1]
        %v1663 = vperm.slane %v1661, 0
        %v1669 = vunpack.c.l.b16 %v1657
        %v1670 = vunpack.c.l.b16 %v1658
        %v1671 = vunpack.c.l.b16 %v1659
        %v1672 = vunpack.c.l.b16 %v1660
        %v1673 = vpack.c.b16 %v1670, %v1669
        %v1674 = vpack.c.b16 %v1672, %v1671
        %v1678 = vsel %vm422, %v1653, 0
        %v1681 = vsel %vm422, %v1654, 0
        %v1684 = vsel %vm422, %v1655, 0
        %v1687 = vsel %vm422, %v1656, 0
        %1689 = vmatpush.bf16.msra.mxu0 0
        %1690 = vmatpush.bf16.msra.mxu0 0
        %1691 = vmatpush.bf16.msra.mxu0 0
        %1692 = vmatpush.bf16.msra.mxu0 0
        %1693 = vmatpush.bf16.msra.mxu0 0
        %1694 = vmatpush.bf16.msra.mxu0 0
        %1695 = vmatpush.bf16.msra.mxu0 %v1674
        %1696 = vmatpush.bf16.msra.mxu0 %v1673
        %1697 = vmatmul.bf16.gmra.mxu0 %v1678
        %v1698 = vpop.f32.mrf.mxu0
        %v1699 = vadd.f32 %v1663, %v1698
        %v1700 = vpop.f32.mrf.mxu0
        %v1701 = vadd.f32 %v1663, %v1700
        %1702 = vmatmul.bf16.gmra.mxu0 %v1681
        %v1703 = vpop.f32.mrf.mxu0
        %v1704 = vadd.f32 %v1663, %v1703
        %v1705 = vpop.f32.mrf.mxu0
        %v1706 = vadd.f32 %v1663, %v1705
        %1707 = vmatmul.bf16.gmra.mxu0 %v1684
        %v1708 = vpop.f32.mrf.mxu0
        %v1709 = vadd.f32 %v1663, %v1708
        %v1710 = vpop.f32.mrf.mxu0
        %v1711 = vadd.f32 %v1663, %v1710
        %1712 = vmatmul.bf16.gmra.mxu0 %v1687
        %v1713 = vpop.f32.mrf.mxu0
        %v1714 = vadd.f32 %v1663, %v1713
        %v1715 = vpop.f32.mrf.mxu0
        %v1716 = vadd.f32 %v1663, %v1715
        %1717 = vdwg.mxu0
        %v1718 = vadd.f32 %v1699, %v305
        %v1719 = vadd.f32 %v1701, %v306
        %v1720 = vadd.f32 %v1704, %v307
        %v1721 = vadd.f32 %v1706, %v308
        %v1722 = vadd.f32 %v1709, %v309
        %v1723 = vadd.f32 %v1711, %v310
        %v1724 = vadd.f32 %v1714, %v311
        %v1725 = vadd.f32 %v1716, %v312
        %v1726 = vmax.f32 %v1718, 0.0
        %v1727 = vmax.f32 %v1719, 0.0
        %v1728 = vmax.f32 %v1720, 0.0
        %v1729 = vmax.f32 %v1721, 0.0
        %v1730 = vmax.f32 %v1722, 0.0
        %v1731 = vmax.f32 %v1723, 0.0
        %v1732 = vmax.f32 %v1724, 0.0
        %v1733 = vmax.f32 %v1725, 0.0
        %1734 = vst [vmem:[%s298] sm:$0xff] %v1726
        %1735 = vst [vmem:[%s298 + $0x8] sm:$0xff] %v1727
        %1736 = vst [vmem:[%s298 + $0x10] sm:$0xff] %v1728
        %1737 = vst [vmem:[%s298 + $0x18] sm:$0xff] %v1729
        %1738 = vst [vmem:[%s298 + $0x20] sm:$0xff] %v1730
        %1739 = vst [vmem:[%s298 + $0x28] sm:$0xff] %v1731
        %1740 = vst [vmem:[%s298 + $0x30] sm:$0xff] %v1732
        %1741 = vst [vmem:[%s298 + $0x38] sm:$0xff] %v1733
        %s1742 = sand.u32 %s203, 1
        %s1743 = scalar_lea.sflag [#allocation4], %s1742
        %s1744 = sand.u32 %s203, 1
        %s1745 = smul.addr %s1744, 64
        %s1746 = scalar_lea.vmem [#allocation3], %s1745
        // Predicated region
        $region53: #{bottleneck_forward.1} parent=51 // pred_check
          %p1747 = pneg %p213
        $region54: #{bottleneck_forward.1} parent=51 // pred_check_branch
          %1749 = sbr.rel (%p1747) target = $region56
        $region55: #{bottleneck_forward.1} parent=51 // pred_region
          %1751 = vsyncadd %s1743, 0
          %s1752 = smul.addr %s22, 8
          %s1753 = smul.addr %s1752, 8
          %s1754 = scalar_lea.hbm %s8, %s1753
          %s1755 = sshll.u32 %s1746, 4
          %s1756 = int_to_ptr.vmem [resolvable:$true] %s1755
          %s1757 = sshll.u32 %s1754, 4
          %s1758 = int_to_ptr.hbm [resolvable:$true] %s1757
          %1763 = dma.vmem_to_hbm [thread:$0]  %s1756, 1024, %s1758, %s1743, 128, 128, 8
        $region56: #{bottleneck_forward.1} parent=51 // pred_fallthru
          _
      $region52: #{bottleneck_forward.1} parent=5 // pred_fallthru
        _
      %p1764 = scmp.le.s32.totalorder 2, %s17
      // Predicated region
      $region57: #{bottleneck_forward.1} parent=5 // pred_check
        %p1765 = pneg %p1764
      $region58: #{bottleneck_forward.1} parent=5 // pred_check_branch
        %1767 = sbr.rel (%p1765) target = $region60
      $region59: #{bottleneck_forward.1} parent=5 // pred_region
        %s1768 = ssub.s32 %s17, 2
        // Predicated region
        $region61: #{bottleneck_forward.1} parent=59 // pred_check
          %p1769 = pneg %p219
        $region62: #{bottleneck_forward.1} parent=59 // pred_check_branch
          %1771 = sbr.rel (%p1769) target = $region64
        $region63: #{bottleneck_forward.1} parent=59 // pred_region
          %s1772 = sand.u32 %s204, 1
          %s1773 = scalar_lea.sflag [#allocation4], %s1772
          %s1774 = sand.u32 %s204, 1
          %s1775 = smul.addr %s1774, 64
          %s1776 = scalar_lea.vmem [#allocation3], %s1775
          %1778 = dma.done %s1773, 1024
        $region64: #{bottleneck_forward.1} parent=59 // pred_fallthru
          _
      $region60: #{bottleneck_forward.1} parent=5 // pred_fallthru
        _
    $region6: #{bottleneck_forward.1} parent=1 // loop_footer
      %s21 = sadd.s32 1, %s17
    $region7: #{bottleneck_forward.1} parent=1 // loop_footer_branch
      %16 = sbr.rel target = $region3
    $region8: #{bottleneck_forward.1} parent=1 // loop_exit
      _
    %1779 = vsyncpa [#allocation4], 1
    %s1780 = scalar_lea.sflag [#allocation4], 1
    %1781 = vsyncpa %s1780, 1

</llo_original>
